<compile_context>
chip_gen: v7x
topology: tpu7x:2x2x1
jax: 0.10.0
libtpu: 0.0.40
codegen_flags: <defaults>
</compile_context>

<pallas_src>
import jax
import jax.numpy as jnp
from jax.experimental import pallas as pl
from jax.experimental.pallas import tpu as pltpu

# ----- small synthetic config (bert-base-chinese scaled down) -----
VOCAB = 100
HIDDEN = 32
HEADS = 2
HEAD_DIM = HIDDEN // HEADS
INTERMEDIATE = 64
LAYERS = 2
MAX_POS = 16
SEQ = 8
BATCH = 2
NUM_CLASSES = 2
LOGIT_PAD = 128            # lane-dense classifier output width
LN_EPS = 1e-12
ATTN_SCALE = 1.0 / (HEAD_DIM ** 0.5)


# ----------------- in-kernel helpers (all f32) -----------------
def _layer_norm(v, g, b):
    mu = jnp.mean(v, axis=-1, keepdims=True)
    var = jnp.mean((v - mu) ** 2, axis=-1, keepdims=True)
    return (v - mu) * jax.lax.rsqrt(var + LN_EPS) * g + b


def _gelu(v):
    # TODO(synk): BERT uses exact erf-GELU; tanh approximation differs slightly.
    c = jnp.float32(0.7978845608028654)  # sqrt(2/pi)
    return 0.5 * v * (1.0 + jnp.tanh(c * (v + 0.044715 * v * v * v)))


# ----------------- single fused forward kernel (no grid) -----------------
def _bert_sentiment_kernel(
    # inputs
    x_emb_ref, bias_ref, emb_g_ref, emb_b_ref,
    wq_ref, bq_ref, wk_ref, bk_ref, wv_ref, bv_ref,
    wo_ref, bo_ref, ln1_g_ref, ln1_b_ref,
    w1_ref, b1_ref, w2_ref, b2_ref, ln2_g_ref, ln2_b_ref,
    wp_ref, bp_ref, wc_ref, bc_ref,
    # output
    out_ref,
):
    f32 = jnp.float32
    bf16 = jnp.bfloat16

    # ---- embedding LayerNorm (f32) ----
    x = _layer_norm(x_emb_ref[...].astype(f32), emb_g_ref[...], emb_b_ref[...])
    bias = bias_ref[...]            # (B*S, B*S) block-diagonal + padding bias

    # ---- encoder layers, statically unrolled; weights resident in VMEM ----
    for l in range(LAYERS):
        xb = x.astype(bf16)
        q_all = jnp.dot(xb, wq_ref[l], preferred_element_type=f32) + bq_ref[l]
        k_all = jnp.dot(xb, wk_ref[l], preferred_element_type=f32) + bk_ref[l]
        v_all = jnp.dot(xb, wv_ref[l], preferred_element_type=f32) + bv_ref[l]

        heads = []
        for h in range(HEADS):
            c0 = h * HEAD_DIM
            q = q_all[:, c0:c0 + HEAD_DIM]                       # (B*S, D) f32
            k = k_all[:, c0:c0 + HEAD_DIM]
            v = v_all[:, c0:c0 + HEAD_DIM]
            # One (B*S, B*S) score matmul for ALL batch rows; cross-batch and
            # padded keys are masked via the precomputed additive bias.
            s = (jnp.dot(q, k.T, preferred_element_type=f32) * ATTN_SCALE
                 + bias)
            s = s - jnp.max(s, axis=-1, keepdims=True)
            p = jnp.exp(s)
            p = p * pl.reciprocal(jnp.sum(p, axis=-1, keepdims=True),
                                  approx=True)
            heads.append(jnp.dot(p, v, preferred_element_type=f32))
        ctx = jnp.concatenate(heads, axis=-1)                    # (B*S, H), in vregs

        attn_out = (jnp.dot(ctx.astype(bf16), wo_ref[l],
                            preferred_element_type=f32) + bo_ref[l])
        x1 = _layer_norm(x + attn_out, ln1_g_ref[l], ln1_b_ref[l])

        hmid = _gelu(jnp.dot(x1.astype(bf16), w1_ref[l],
                             preferred_element_type=f32) + b1_ref[l])
        ffn = (jnp.dot(hmid.astype(bf16), w2_ref[l],
                       preferred_element_type=f32) + b2_ref[l])
        x = _layer_norm(x1 + ffn, ln2_g_ref[l], ln2_b_ref[l])

    # ---- BERT pooler (tanh Linear) + Dropout(p=0.25)=identity + classifier ----
    # Both are row-wise, so apply to all B*S rows and write one lane-dense
    # (B*S, 128) block; the wrapper selects the [CLS] rows and first 2 lanes.
    pooled = jnp.tanh(jnp.dot(x.astype(bf16), wp_ref[...],
                              preferred_element_type=f32) + bp_ref[...])
    logits = (jnp.dot(pooled.astype(bf16), wc_ref[...],
                      preferred_element_type=f32) + bc_ref[...])
    out_ref[...] = logits.astype(out_ref.dtype)


# ----------------- parameter init (deterministic, synthetic, pre-stacked) ---
def init_params(key):
    def nrm(k, shape, scale=0.02):
        return scale * jax.random.normal(k, shape, dtype=jnp.float32)

    keys = iter(jax.random.split(key, 5 + LAYERS * 6))
    bf16 = jnp.bfloat16

    # Classifier weights padded to a 128-lane slab (lane-dense store).
    wc_real = nrm(next(keys), (HIDDEN, NUM_CLASSES))
    wc_pad = jnp.zeros((HIDDEN, LOGIT_PAD), jnp.float32).at[:, :NUM_CLASSES].set(wc_real)

    params = {
        "word_emb": nrm(next(keys), (VOCAB, HIDDEN)),
        "pos_emb": nrm(next(keys), (MAX_POS, HIDDEN)),
        "type_emb": nrm(next(keys), (2, HIDDEN)),
        "emb_ln_g": jnp.ones((1, HIDDEN), jnp.float32),
        "emb_ln_b": jnp.zeros((1, HIDDEN), jnp.float32),
        "wp": nrm(next(keys), (HIDDEN, HIDDEN)).astype(bf16),        # pooler
        "bp": jnp.zeros((1, HIDDEN), jnp.float32),
        "wc_pad": wc_pad.astype(bf16),                               # self.out = nn.Linear(H, 2)
        "bc_pad": jnp.zeros((1, LOGIT_PAD), jnp.float32),
    }

    wq, wk, wv, wo, w1, w2 = [], [], [], [], [], []
    for _ in range(LAYERS):
        wq.append(nrm(next(keys), (HIDDEN, HIDDEN)))
        wk.append(nrm(next(keys), (HIDDEN, HIDDEN)))
        wv.append(nrm(next(keys), (HIDDEN, HIDDEN)))
        wo.append(nrm(next(keys), (HIDDEN, HIDDEN)))
        w1.append(nrm(next(keys), (HIDDEN, INTERMEDIATE)))
        w2.append(nrm(next(keys), (INTERMEDIATE, HIDDEN)))

    params.update({
        "wq": jnp.stack(wq).astype(bf16),                            # (L, H, H)
        "bq": jnp.zeros((LAYERS, 1, HIDDEN), jnp.float32),
        "wk": jnp.stack(wk).astype(bf16),
        "bk": jnp.zeros((LAYERS, 1, HIDDEN), jnp.float32),
        "wv": jnp.stack(wv).astype(bf16),
        "bv": jnp.zeros((LAYERS, 1, HIDDEN), jnp.float32),
        "wo": jnp.stack(wo).astype(bf16),
        "bo": jnp.zeros((LAYERS, 1, HIDDEN), jnp.float32),
        "ln1_g": jnp.ones((LAYERS, 1, HIDDEN), jnp.float32),
        "ln1_b": jnp.zeros((LAYERS, 1, HIDDEN), jnp.float32),
        "w1": jnp.stack(w1).astype(bf16),                            # (L, H, I)
        "b1": jnp.zeros((LAYERS, 1, INTERMEDIATE), jnp.float32),
        "w2": jnp.stack(w2).astype(bf16),                            # (L, I, H)
        "b2": jnp.zeros((LAYERS, 1, HIDDEN), jnp.float32),
        "ln2_g": jnp.ones((LAYERS, 1, HIDDEN), jnp.float32),
        "ln2_b": jnp.zeros((LAYERS, 1, HIDDEN), jnp.float32),
    })
    return params


# ----------------- Sentiment.forward -----------------
@jax.jit
def sentiment_forward(params, input_ids, attention_mask):
    B, S = input_ids.shape
    pos_ids = jnp.arange(S)
    # Embedding-table gathers stay in plain JAX (glue); everything downstream
    # is a single fused, ungridded pallas_call.
    # TODO(synk): token_type_ids hard-coded to 0 (matches encode_plus usage here).
    x_emb = (params["word_emb"][input_ids]
             + params["pos_emb"][pos_ids][None, :, :]
             + params["type_emb"][0][None, None, :]).reshape(B * S, HIDDEN)

    # Combined additive attention bias over flattened (B*S) rows/cols:
    # 0 where (same batch AND key not padded), -10000 otherwise.
    mask_f = attention_mask.astype(jnp.float32).reshape(B * S)       # per-key pad
    batch_ids = jnp.repeat(jnp.arange(B), S)
    same = (batch_ids[:, None] == batch_ids[None, :]).astype(jnp.float32)
    attn_bias = (1.0 - same * mask_f[None, :]) * -10000.0            # (B*S, B*S)

    out = pl.pallas_call(
        _bert_sentiment_kernel,
        out_shape=jax.ShapeDtypeStruct((B * S, LOGIT_PAD), jnp.float32),
        in_specs=[pl.BlockSpec(memory_space=pltpu.MemorySpace.VMEM)] * 24,
        out_specs=pl.BlockSpec(memory_space=pltpu.MemorySpace.VMEM),
    )(x_emb, attn_bias,
      params["emb_ln_g"], params["emb_ln_b"],
      params["wq"], params["bq"], params["wk"], params["bk"],
      params["wv"], params["bv"], params["wo"], params["bo"],
      params["ln1_g"], params["ln1_b"], params["w1"], params["b1"],
      params["w2"], params["b2"], params["ln2_g"], params["ln2_b"],
      params["wp"], params["bp"], params["wc_pad"], params["bc_pad"])

    # Select the [CLS] row of each example and the real logit lanes.
    return out.reshape(B, S, LOGIT_PAD)[:, 0, :NUM_CLASSES]


if __name__ == "__main__":
    root = jax.random.PRNGKey(0)
    k_params, k_ids = jax.random.split(root)
    params = init_params(k_params)

    input_ids = jax.random.randint(k_ids, (BATCH, SEQ), 0, VOCAB, dtype=jnp.int32)
    # second example has 2 padding positions at the end
    attention_mask = jnp.array(
        [[1, 1, 1, 1, 1, 1, 1, 1],
         [1, 1, 1, 1, 1, 1, 0, 0]], dtype=jnp.int32)

    logits = sentiment_forward(params, input_ids, attention_mask)
    jax.block_until_ready(logits)
    assert logits.shape == (BATCH, NUM_CLASSES) and logits.dtype == jnp.float32
    print("KERNEL_OK")
</pallas_src>

<mosaic_0001>
module attributes {stable_mosaic.version = 11 : i64} {
  func.func @_bert_sentiment_kernel(%arg0: memref<16x32xf32, #tpu.memory_space<vmem>>, %arg1: memref<16x16xf32, #tpu.memory_space<vmem>>, %arg2: memref<1x32xf32, #tpu.memory_space<vmem>>, %arg3: memref<1x32xf32, #tpu.memory_space<vmem>>, %arg4: memref<2x32x32xbf16, #tpu.memory_space<vmem>>, %arg5: memref<2x1x32xf32, #tpu.memory_space<vmem>>, %arg6: memref<2x32x32xbf16, #tpu.memory_space<vmem>>, %arg7: memref<2x1x32xf32, #tpu.memory_space<vmem>>, %arg8: memref<2x32x32xbf16, #tpu.memory_space<vmem>>, %arg9: memref<2x1x32xf32, #tpu.memory_space<vmem>>, %arg10: memref<2x32x32xbf16, #tpu.memory_space<vmem>>, %arg11: memref<2x1x32xf32, #tpu.memory_space<vmem>>, %arg12: memref<2x1x32xf32, #tpu.memory_space<vmem>>, %arg13: memref<2x1x32xf32, #tpu.memory_space<vmem>>, %arg14: memref<2x32x64xbf16, #tpu.memory_space<vmem>>, %arg15: memref<2x1x64xf32, #tpu.memory_space<vmem>>, %arg16: memref<2x64x32xbf16, #tpu.memory_space<vmem>>, %arg17: memref<2x1x32xf32, #tpu.memory_space<vmem>>, %arg18: memref<2x1x32xf32, #tpu.memory_space<vmem>>, %arg19: memref<2x1x32xf32, #tpu.memory_space<vmem>>, %arg20: memref<32x32xbf16, #tpu.memory_space<vmem>>, %arg21: memref<1x32xf32, #tpu.memory_space<vmem>>, %arg22: memref<32x128xbf16, #tpu.memory_space<vmem>>, %arg23: memref<1x128xf32, #tpu.memory_space<vmem>>, %arg24: memref<16x128xf32, #tpu.memory_space<vmem>>) attributes {dimension_semantics = [], scalar_prefetch = 0 : i64, scratch_operands = 0 : i64, tpu.core_type = #tpu.core_type<tc>} {
    %c0 = arith.constant 0 : index
    %c0_0 = arith.constant 0 : index
    %0 = vector.load %arg0[%c0, %c0_0] : memref<16x32xf32, #tpu.memory_space<vmem>>, vector<16x32xf32>
    %c0_1 = arith.constant 0 : index
    %c0_2 = arith.constant 0 : index
    %1 = vector.load %arg2[%c0_1, %c0_2] : memref<1x32xf32, #tpu.memory_space<vmem>>, vector<1x32xf32>
    %c0_3 = arith.constant 0 : index
    %c0_4 = arith.constant 0 : index
    %2 = vector.load %arg3[%c0_3, %c0_4] : memref<1x32xf32, #tpu.memory_space<vmem>>, vector<1x32xf32>
    %cst = arith.constant dense<0.000000e+00> : vector<16xf32>
    %3 = vector.multi_reduction <add>, %0, %cst [1] : vector<16x32xf32> to vector<16xf32>
    %4 = vector.shape_cast %3 : vector<16xf32> to vector<16x1xf32>
    %cst_5 = arith.constant 3.200000e+01 : f32
    %5 = vector.broadcast %cst_5 : f32 to vector<16x1xf32>
    %6 = arith.divf %4, %5 : vector<16x1xf32>
    %7 = vector.broadcast %6 : vector<16x1xf32> to vector<16x32xf32>
    %8 = arith.subf %0, %7 : vector<16x32xf32>
    %9 = arith.mulf %8, %8 : vector<16x32xf32>
    %cst_6 = arith.constant dense<0.000000e+00> : vector<16xf32>
    %10 = vector.multi_reduction <add>, %9, %cst_6 [1] : vector<16x32xf32> to vector<16xf32>
    %11 = vector.shape_cast %10 : vector<16xf32> to vector<16x1xf32>
    %cst_7 = arith.constant 3.200000e+01 : f32
    %12 = vector.broadcast %cst_7 : f32 to vector<16x1xf32>
    %13 = arith.divf %11, %12 : vector<16x1xf32>
    %14 = vector.broadcast %6 : vector<16x1xf32> to vector<16x32xf32>
    %15 = arith.subf %0, %14 : vector<16x32xf32>
    %cst_8 = arith.constant 9.99999996E-13 : f32
    %16 = vector.broadcast %cst_8 : f32 to vector<16x1xf32>
    %17 = arith.addf %13, %16 : vector<16x1xf32>
    %18 = math.rsqrt %17 : vector<16x1xf32>
    %19 = vector.broadcast %18 : vector<16x1xf32> to vector<16x32xf32>
    %20 = arith.mulf %15, %19 : vector<16x32xf32>
    %21 = vector.broadcast %1 : vector<1x32xf32> to vector<16x32xf32>
    %22 = arith.mulf %20, %21 : vector<16x32xf32>
    %23 = vector.broadcast %2 : vector<1x32xf32> to vector<16x32xf32>
    %24 = arith.addf %22, %23 : vector<16x32xf32>
    %c0_9 = arith.constant 0 : index
    %c0_10 = arith.constant 0 : index
    %25 = vector.load %arg1[%c0_9, %c0_10] : memref<16x16xf32, #tpu.memory_space<vmem>>, vector<16x16xf32>
    %26 = arith.truncf %24 : vector<16x32xf32> to vector<16x32xbf16>
    %c0_11 = arith.constant 0 : index
    %c0_12 = arith.constant 0 : index
    %c0_13 = arith.constant 0 : index
    %27 = vector.load %arg4[%c0_11, %c0_12, %c0_13] : memref<2x32x32xbf16, #tpu.memory_space<vmem>>, vector<1x32x32xbf16>
    %28 = vector.shape_cast %27 : vector<1x32x32xbf16> to vector<32x32xbf16>
    %cst_14 = arith.constant dense<0.000000e+00> : vector<16x32xf32>
    %29 = tpu.matmul %26, %28, %cst_14 {dimension_numbers = #tpu.dot_dimension_numbers<[1], [0], [0], [1], [0, 0, 1, 1], [], []>} : vector<16x32xbf16>, vector<32x32xbf16>, vector<16x32xf32> -> vector<16x32xf32>
    %c0_15 = arith.constant 0 : index
    %c0_16 = arith.constant 0 : index
    %c0_17 = arith.constant 0 : index
    %30 = vector.load %arg5[%c0_15, %c0_16, %c0_17] : memref<2x1x32xf32, #tpu.memory_space<vmem>>, vector<1x1x32xf32>
    %31 = vector.shape_cast %30 : vector<1x1x32xf32> to vector<1x32xf32>
    %32 = vector.broadcast %31 : vector<1x32xf32> to vector<16x32xf32>
    %33 = arith.addf %29, %32 : vector<16x32xf32>
    %c0_18 = arith.constant 0 : index
    %c0_19 = arith.constant 0 : index
    %c0_20 = arith.constant 0 : index
    %34 = vector.load %arg6[%c0_18, %c0_19, %c0_20] : memref<2x32x32xbf16, #tpu.memory_space<vmem>>, vector<1x32x32xbf16>
    %35 = vector.shape_cast %34 : vector<1x32x32xbf16> to vector<32x32xbf16>
    %cst_21 = arith.constant dense<0.000000e+00> : vector<16x32xf32>
    %36 = tpu.matmul %26, %35, %cst_21 {dimension_numbers = #tpu.dot_dimension_numbers<[1], [0], [0], [1], [0, 0, 1, 1], [], []>} : vector<16x32xbf16>, vector<32x32xbf16>, vector<16x32xf32> -> vector<16x32xf32>
    %c0_22 = arith.constant 0 : index
    %c0_23 = arith.constant 0 : index
    %c0_24 = arith.constant 0 : index
    %37 = vector.load %arg7[%c0_22, %c0_23, %c0_24] : memref<2x1x32xf32, #tpu.memory_space<vmem>>, vector<1x1x32xf32>
    %38 = vector.shape_cast %37 : vector<1x1x32xf32> to vector<1x32xf32>
    %39 = vector.broadcast %38 : vector<1x32xf32> to vector<16x32xf32>
    %40 = arith.addf %36, %39 : vector<16x32xf32>
    %c0_25 = arith.constant 0 : index
    %c0_26 = arith.constant 0 : index
    %c0_27 = arith.constant 0 : index
    %41 = vector.load %arg8[%c0_25, %c0_26, %c0_27] : memref<2x32x32xbf16, #tpu.memory_space<vmem>>, vector<1x32x32xbf16>
    %42 = vector.shape_cast %41 : vector<1x32x32xbf16> to vector<32x32xbf16>
    %cst_28 = arith.constant dense<0.000000e+00> : vector<16x32xf32>
    %43 = tpu.matmul %26, %42, %cst_28 {dimension_numbers = #tpu.dot_dimension_numbers<[1], [0], [0], [1], [0, 0, 1, 1], [], []>} : vector<16x32xbf16>, vector<32x32xbf16>, vector<16x32xf32> -> vector<16x32xf32>
    %c0_29 = arith.constant 0 : index
    %c0_30 = arith.constant 0 : index
    %c0_31 = arith.constant 0 : index
    %44 = vector.load %arg9[%c0_29, %c0_30, %c0_31] : memref<2x1x32xf32, #tpu.memory_space<vmem>>, vector<1x1x32xf32>
    %45 = vector.shape_cast %44 : vector<1x1x32xf32> to vector<1x32xf32>
    %46 = vector.broadcast %45 : vector<1x32xf32> to vector<16x32xf32>
    %47 = arith.addf %43, %46 : vector<16x32xf32>
    %48 = vector.extract_strided_slice %33 {offsets = [0, 0], sizes = [16, 16], strides = [1, 1]} : vector<16x32xf32> to vector<16x16xf32>
    %49 = vector.extract_strided_slice %40 {offsets = [0, 0], sizes = [16, 16], strides = [1, 1]} : vector<16x32xf32> to vector<16x16xf32>
    %50 = vector.extract_strided_slice %47 {offsets = [0, 0], sizes = [16, 16], strides = [1, 1]} : vector<16x32xf32> to vector<16x16xf32>
    %51 = tpu.transpose %49, [1, 0] : vector<16x16xf32> -> vector<16x16xf32>
    %cst_32 = arith.constant dense<0.000000e+00> : vector<16x16xf32>
    %52 = tpu.matmul %48, %51, %cst_32 {dimension_numbers = #tpu.dot_dimension_numbers<[1], [0], [0], [1], [0, 0, 1, 1], [], []>} : vector<16x16xf32>, vector<16x16xf32>, vector<16x16xf32> -> vector<16x16xf32>
    %cst_33 = arith.constant 2.500000e-01 : f32
    %53 = vector.broadcast %cst_33 : f32 to vector<16x16xf32>
    %54 = arith.mulf %52, %53 : vector<16x16xf32>
    %55 = arith.addf %54, %25 : vector<16x16xf32>
    %cst_34 = arith.constant dense<0xFF800000> : vector<16xf32>
    %56 = vector.multi_reduction <maximumf>, %55, %cst_34 [1] : vector<16x16xf32> to vector<16xf32>
    %57 = vector.shape_cast %56 : vector<16xf32> to vector<16x1xf32>
    %58 = vector.broadcast %57 : vector<16x1xf32> to vector<16x16xf32>
    %59 = arith.subf %55, %58 : vector<16x16xf32>
    %60 = math.exp %59 : vector<16x16xf32>
    %cst_35 = arith.constant dense<0.000000e+00> : vector<16xf32>
    %61 = vector.multi_reduction <add>, %60, %cst_35 [1] : vector<16x16xf32> to vector<16xf32>
    %62 = vector.shape_cast %61 : vector<16xf32> to vector<16x1xf32>
    %63 = tpu.reciprocal %62 {approx = true} : vector<16x1xf32> -> vector<16x1xf32>
    %64 = vector.broadcast %63 : vector<16x1xf32> to vector<16x16xf32>
    %65 = arith.mulf %60, %64 : vector<16x16xf32>
    %cst_36 = arith.constant dense<0.000000e+00> : vector<16x16xf32>
    %66 = tpu.matmul %65, %50, %cst_36 {dimension_numbers = #tpu.dot_dimension_numbers<[1], [0], [0], [1], [0, 0, 1, 1], [], []>} : vector<16x16xf32>, vector<16x16xf32>, vector<16x16xf32> -> vector<16x16xf32>
    %67 = vector.extract_strided_slice %33 {offsets = [0, 16], sizes = [16, 16], strides = [1, 1]} : vector<16x32xf32> to vector<16x16xf32>
    %68 = vector.extract_strided_slice %40 {offsets = [0, 16], sizes = [16, 16], strides = [1, 1]} : vector<16x32xf32> to vector<16x16xf32>
    %69 = vector.extract_strided_slice %47 {offsets = [0, 16], sizes = [16, 16], strides = [1, 1]} : vector<16x32xf32> to vector<16x16xf32>
    %70 = tpu.transpose %68, [1, 0] : vector<16x16xf32> -> vector<16x16xf32>
    %cst_37 = arith.constant dense<0.000000e+00> : vector<16x16xf32>
    %71 = tpu.matmul %67, %70, %cst_37 {dimension_numbers = #tpu.dot_dimension_numbers<[1], [0], [0], [1], [0, 0, 1, 1], [], []>} : vector<16x16xf32>, vector<16x16xf32>, vector<16x16xf32> -> vector<16x16xf32>
    %cst_38 = arith.constant 2.500000e-01 : f32
    %72 = vector.broadcast %cst_38 : f32 to vector<16x16xf32>
    %73 = arith.mulf %71, %72 : vector<16x16xf32>
    %74 = arith.addf %73, %25 : vector<16x16xf32>
    %cst_39 = arith.constant dense<0xFF800000> : vector<16xf32>
    %75 = vector.multi_reduction <maximumf>, %74, %cst_39 [1] : vector<16x16xf32> to vector<16xf32>
    %76 = vector.shape_cast %75 : vector<16xf32> to vector<16x1xf32>
    %77 = vector.broadcast %76 : vector<16x1xf32> to vector<16x16xf32>
    %78 = arith.subf %74, %77 : vector<16x16xf32>
    %79 = math.exp %78 : vector<16x16xf32>
    %cst_40 = arith.constant dense<0.000000e+00> : vector<16xf32>
    %80 = vector.multi_reduction <add>, %79, %cst_40 [1] : vector<16x16xf32> to vector<16xf32>
    %81 = vector.shape_cast %80 : vector<16xf32> to vector<16x1xf32>
    %82 = tpu.reciprocal %81 {approx = true} : vector<16x1xf32> -> vector<16x1xf32>
    %83 = vector.broadcast %82 : vector<16x1xf32> to vector<16x16xf32>
    %84 = arith.mulf %79, %83 : vector<16x16xf32>
    %cst_41 = arith.constant dense<0.000000e+00> : vector<16x16xf32>
    %85 = tpu.matmul %84, %69, %cst_41 {dimension_numbers = #tpu.dot_dimension_numbers<[1], [0], [0], [1], [0, 0, 1, 1], [], []>} : vector<16x16xf32>, vector<16x16xf32>, vector<16x16xf32> -> vector<16x16xf32>
    %86 = tpu.concatenate %66, %85 in 1 : vector<16x16xf32>, vector<16x16xf32> -> vector<16x32xf32>
    %87 = arith.truncf %86 : vector<16x32xf32> to vector<16x32xbf16>
    %c0_42 = arith.constant 0 : index
    %c0_43 = arith.constant 0 : index
    %c0_44 = arith.constant 0 : index
    %88 = vector.load %arg10[%c0_42, %c0_43, %c0_44] : memref<2x32x32xbf16, #tpu.memory_space<vmem>>, vector<1x32x32xbf16>
    %89 = vector.shape_cast %88 : vector<1x32x32xbf16> to vector<32x32xbf16>
    %cst_45 = arith.constant dense<0.000000e+00> : vector<16x32xf32>
    %90 = tpu.matmul %87, %89, %cst_45 {dimension_numbers = #tpu.dot_dimension_numbers<[1], [0], [0], [1], [0, 0, 1, 1], [], []>} : vector<16x32xbf16>, vector<32x32xbf16>, vector<16x32xf32> -> vector<16x32xf32>
    %c0_46 = arith.constant 0 : index
    %c0_47 = arith.constant 0 : index
    %c0_48 = arith.constant 0 : index
    %91 = vector.load %arg11[%c0_46, %c0_47, %c0_48] : memref<2x1x32xf32, #tpu.memory_space<vmem>>, vector<1x1x32xf32>
    %92 = vector.shape_cast %91 : vector<1x1x32xf32> to vector<1x32xf32>
    %93 = vector.broadcast %92 : vector<1x32xf32> to vector<16x32xf32>
    %94 = arith.addf %90, %93 : vector<16x32xf32>
    %95 = arith.addf %24, %94 : vector<16x32xf32>
    %c0_49 = arith.constant 0 : index
    %c0_50 = arith.constant 0 : index
    %c0_51 = arith.constant 0 : index
    %96 = vector.load %arg12[%c0_49, %c0_50, %c0_51] : memref<2x1x32xf32, #tpu.memory_space<vmem>>, vector<1x1x32xf32>
    %97 = vector.shape_cast %96 : vector<1x1x32xf32> to vector<1x32xf32>
    %c0_52 = arith.constant 0 : index
    %c0_53 = arith.constant 0 : index
    %c0_54 = arith.constant 0 : index
    %98 = vector.load %arg13[%c0_52, %c0_53, %c0_54] : memref<2x1x32xf32, #tpu.memory_space<vmem>>, vector<1x1x32xf32>
    %99 = vector.shape_cast %98 : vector<1x1x32xf32> to vector<1x32xf32>
    %cst_55 = arith.constant dense<0.000000e+00> : vector<16xf32>
    %100 = vector.multi_reduction <add>, %95, %cst_55 [1] : vector<16x32xf32> to vector<16xf32>
    %101 = vector.shape_cast %100 : vector<16xf32> to vector<16x1xf32>
    %cst_56 = arith.constant 3.200000e+01 : f32
    %102 = vector.broadcast %cst_56 : f32 to vector<16x1xf32>
    %103 = arith.divf %101, %102 : vector<16x1xf32>
    %104 = vector.broadcast %103 : vector<16x1xf32> to vector<16x32xf32>
    %105 = arith.subf %95, %104 : vector<16x32xf32>
    %106 = arith.mulf %105, %105 : vector<16x32xf32>
    %cst_57 = arith.constant dense<0.000000e+00> : vector<16xf32>
    %107 = vector.multi_reduction <add>, %106, %cst_57 [1] : vector<16x32xf32> to vector<16xf32>
    %108 = vector.shape_cast %107 : vector<16xf32> to vector<16x1xf32>
    %cst_58 = arith.constant 3.200000e+01 : f32
    %109 = vector.broadcast %cst_58 : f32 to vector<16x1xf32>
    %110 = arith.divf %108, %109 : vector<16x1xf32>
    %111 = vector.broadcast %103 : vector<16x1xf32> to vector<16x32xf32>
    %112 = arith.subf %95, %111 : vector<16x32xf32>
    %cst_59 = arith.constant 9.99999996E-13 : f32
    %113 = vector.broadcast %cst_59 : f32 to vector<16x1xf32>
    %114 = arith.addf %110, %113 : vector<16x1xf32>
    %115 = math.rsqrt %114 : vector<16x1xf32>
    %116 = vector.broadcast %115 : vector<16x1xf32> to vector<16x32xf32>
    %117 = arith.mulf %112, %116 : vector<16x32xf32>
    %118 = vector.broadcast %97 : vector<1x32xf32> to vector<16x32xf32>
    %119 = arith.mulf %117, %118 : vector<16x32xf32>
    %120 = vector.broadcast %99 : vector<1x32xf32> to vector<16x32xf32>
    %121 = arith.addf %119, %120 : vector<16x32xf32>
    %122 = arith.truncf %121 : vector<16x32xf32> to vector<16x32xbf16>
    %c0_60 = arith.constant 0 : index
    %c0_61 = arith.constant 0 : index
    %c0_62 = arith.constant 0 : index
    %123 = vector.load %arg14[%c0_60, %c0_61, %c0_62] : memref<2x32x64xbf16, #tpu.memory_space<vmem>>, vector<1x32x64xbf16>
    %124 = vector.shape_cast %123 : vector<1x32x64xbf16> to vector<32x64xbf16>
    %cst_63 = arith.constant dense<0.000000e+00> : vector<16x64xf32>
    %125 = tpu.matmul %122, %124, %cst_63 {dimension_numbers = #tpu.dot_dimension_numbers<[1], [0], [0], [1], [0, 0, 1, 1], [], []>} : vector<16x32xbf16>, vector<32x64xbf16>, vector<16x64xf32> -> vector<16x64xf32>
    %c0_64 = arith.constant 0 : index
    %c0_65 = arith.constant 0 : index
    %c0_66 = arith.constant 0 : index
    %126 = vector.load %arg15[%c0_64, %c0_65, %c0_66] : memref<2x1x64xf32, #tpu.memory_space<vmem>>, vector<1x1x64xf32>
    %127 = vector.shape_cast %126 : vector<1x1x64xf32> to vector<1x64xf32>
    %128 = vector.broadcast %127 : vector<1x64xf32> to vector<16x64xf32>
    %129 = arith.addf %125, %128 : vector<16x64xf32>
    %cst_67 = arith.constant 5.000000e-01 : f32
    %130 = vector.broadcast %cst_67 : f32 to vector<16x64xf32>
    %131 = arith.mulf %130, %129 : vector<16x64xf32>
    %cst_68 = arith.constant 4.471500e-02 : f32
    %132 = vector.broadcast %cst_68 : f32 to vector<16x64xf32>
    %133 = arith.mulf %132, %129 : vector<16x64xf32>
    %134 = arith.mulf %133, %129 : vector<16x64xf32>
    %135 = arith.mulf %134, %129 : vector<16x64xf32>
    %136 = arith.addf %129, %135 : vector<16x64xf32>
    %cst_69 = arith.constant 0.797884583 : f32
    %137 = vector.broadcast %cst_69 : f32 to vector<16x64xf32>
    %138 = arith.mulf %137, %136 : vector<16x64xf32>
    %139 = math.tanh %138 : vector<16x64xf32>
    %cst_70 = arith.constant 1.000000e+00 : f32
    %140 = vector.broadcast %cst_70 : f32 to vector<16x64xf32>
    %141 = arith.addf %140, %139 : vector<16x64xf32>
    %142 = arith.mulf %131, %141 : vector<16x64xf32>
    %143 = arith.truncf %142 : vector<16x64xf32> to vector<16x64xbf16>
    %c0_71 = arith.constant 0 : index
    %c0_72 = arith.constant 0 : index
    %c0_73 = arith.constant 0 : index
    %144 = vector.load %arg16[%c0_71, %c0_72, %c0_73] : memref<2x64x32xbf16, #tpu.memory_space<vmem>>, vector<1x64x32xbf16>
    %145 = vector.shape_cast %144 : vector<1x64x32xbf16> to vector<64x32xbf16>
    %cst_74 = arith.constant dense<0.000000e+00> : vector<16x32xf32>
    %146 = tpu.matmul %143, %145, %cst_74 {dimension_numbers = #tpu.dot_dimension_numbers<[1], [0], [0], [1], [0, 0, 1, 1], [], []>} : vector<16x64xbf16>, vector<64x32xbf16>, vector<16x32xf32> -> vector<16x32xf32>
    %c0_75 = arith.constant 0 : index
    %c0_76 = arith.constant 0 : index
    %c0_77 = arith.constant 0 : index
    %147 = vector.load %arg17[%c0_75, %c0_76, %c0_77] : memref<2x1x32xf32, #tpu.memory_space<vmem>>, vector<1x1x32xf32>
    %148 = vector.shape_cast %147 : vector<1x1x32xf32> to vector<1x32xf32>
    %149 = vector.broadcast %148 : vector<1x32xf32> to vector<16x32xf32>
    %150 = arith.addf %146, %149 : vector<16x32xf32>
    %151 = arith.addf %121, %150 : vector<16x32xf32>
    %c0_78 = arith.constant 0 : index
    %c0_79 = arith.constant 0 : index
    %c0_80 = arith.constant 0 : index
    %152 = vector.load %arg18[%c0_78, %c0_79, %c0_80] : memref<2x1x32xf32, #tpu.memory_space<vmem>>, vector<1x1x32xf32>
    %153 = vector.shape_cast %152 : vector<1x1x32xf32> to vector<1x32xf32>
    %c0_81 = arith.constant 0 : index
    %c0_82 = arith.constant 0 : index
    %c0_83 = arith.constant 0 : index
    %154 = vector.load %arg19[%c0_81, %c0_82, %c0_83] : memref<2x1x32xf32, #tpu.memory_space<vmem>>, vector<1x1x32xf32>
    %155 = vector.shape_cast %154 : vector<1x1x32xf32> to vector<1x32xf32>
    %cst_84 = arith.constant dense<0.000000e+00> : vector<16xf32>
    %156 = vector.multi_reduction <add>, %151, %cst_84 [1] : vector<16x32xf32> to vector<16xf32>
    %157 = vector.shape_cast %156 : vector<16xf32> to vector<16x1xf32>
    %cst_85 = arith.constant 3.200000e+01 : f32
    %158 = vector.broadcast %cst_85 : f32 to vector<16x1xf32>
    %159 = arith.divf %157, %158 : vector<16x1xf32>
    %160 = vector.broadcast %159 : vector<16x1xf32> to vector<16x32xf32>
    %161 = arith.subf %151, %160 : vector<16x32xf32>
    %162 = arith.mulf %161, %161 : vector<16x32xf32>
    %cst_86 = arith.constant dense<0.000000e+00> : vector<16xf32>
    %163 = vector.multi_reduction <add>, %162, %cst_86 [1] : vector<16x32xf32> to vector<16xf32>
    %164 = vector.shape_cast %163 : vector<16xf32> to vector<16x1xf32>
    %cst_87 = arith.constant 3.200000e+01 : f32
    %165 = vector.broadcast %cst_87 : f32 to vector<16x1xf32>
    %166 = arith.divf %164, %165 : vector<16x1xf32>
    %167 = vector.broadcast %159 : vector<16x1xf32> to vector<16x32xf32>
    %168 = arith.subf %151, %167 : vector<16x32xf32>
    %cst_88 = arith.constant 9.99999996E-13 : f32
    %169 = vector.broadcast %cst_88 : f32 to vector<16x1xf32>
    %170 = arith.addf %166, %169 : vector<16x1xf32>
    %171 = math.rsqrt %170 : vector<16x1xf32>
    %172 = vector.broadcast %171 : vector<16x1xf32> to vector<16x32xf32>
    %173 = arith.mulf %168, %172 : vector<16x32xf32>
    %174 = vector.broadcast %153 : vector<1x32xf32> to vector<16x32xf32>
    %175 = arith.mulf %173, %174 : vector<16x32xf32>
    %176 = vector.broadcast %155 : vector<1x32xf32> to vector<16x32xf32>
    %177 = arith.addf %175, %176 : vector<16x32xf32>
    %178 = arith.truncf %177 : vector<16x32xf32> to vector<16x32xbf16>
    %c1 = arith.constant 1 : index
    %c0_89 = arith.constant 0 : index
    %c0_90 = arith.constant 0 : index
    %179 = vector.load %arg4[%c1, %c0_89, %c0_90] : memref<2x32x32xbf16, #tpu.memory_space<vmem>>, vector<1x32x32xbf16>
    %180 = vector.shape_cast %179 : vector<1x32x32xbf16> to vector<32x32xbf16>
    %cst_91 = arith.constant dense<0.000000e+00> : vector<16x32xf32>
    %181 = tpu.matmul %178, %180, %cst_91 {dimension_numbers = #tpu.dot_dimension_numbers<[1], [0], [0], [1], [0, 0, 1, 1], [], []>} : vector<16x32xbf16>, vector<32x32xbf16>, vector<16x32xf32> -> vector<16x32xf32>
    %c1_92 = arith.constant 1 : index
    %c0_93 = arith.constant 0 : index
    %c0_94 = arith.constant 0 : index
    %182 = vector.load %arg5[%c1_92, %c0_93, %c0_94] : memref<2x1x32xf32, #tpu.memory_space<vmem>>, vector<1x1x32xf32>
    %183 = vector.shape_cast %182 : vector<1x1x32xf32> to vector<1x32xf32>
    %184 = vector.broadcast %183 : vector<1x32xf32> to vector<16x32xf32>
    %185 = arith.addf %181, %184 : vector<16x32xf32>
    %c1_95 = arith.constant 1 : index
    %c0_96 = arith.constant 0 : index
    %c0_97 = arith.constant 0 : index
    %186 = vector.load %arg6[%c1_95, %c0_96, %c0_97] : memref<2x32x32xbf16, #tpu.memory_space<vmem>>, vector<1x32x32xbf16>
    %187 = vector.shape_cast %186 : vector<1x32x32xbf16> to vector<32x32xbf16>
    %cst_98 = arith.constant dense<0.000000e+00> : vector<16x32xf32>
    %188 = tpu.matmul %178, %187, %cst_98 {dimension_numbers = #tpu.dot_dimension_numbers<[1], [0], [0], [1], [0, 0, 1, 1], [], []>} : vector<16x32xbf16>, vector<32x32xbf16>, vector<16x32xf32> -> vector<16x32xf32>
    %c1_99 = arith.constant 1 : index
    %c0_100 = arith.constant 0 : index
    %c0_101 = arith.constant 0 : index
    %189 = vector.load %arg7[%c1_99, %c0_100, %c0_101] : memref<2x1x32xf32, #tpu.memory_space<vmem>>, vector<1x1x32xf32>
    %190 = vector.shape_cast %189 : vector<1x1x32xf32> to vector<1x32xf32>
    %191 = vector.broadcast %190 : vector<1x32xf32> to vector<16x32xf32>
    %192 = arith.addf %188, %191 : vector<16x32xf32>
    %c1_102 = arith.constant 1 : index
    %c0_103 = arith.constant 0 : index
    %c0_104 = arith.constant 0 : index
    %193 = vector.load %arg8[%c1_102, %c0_103, %c0_104] : memref<2x32x32xbf16, #tpu.memory_space<vmem>>, vector<1x32x32xbf16>
    %194 = vector.shape_cast %193 : vector<1x32x32xbf16> to vector<32x32xbf16>
    %cst_105 = arith.constant dense<0.000000e+00> : vector<16x32xf32>
    %195 = tpu.matmul %178, %194, %cst_105 {dimension_numbers = #tpu.dot_dimension_numbers<[1], [0], [0], [1], [0, 0, 1, 1], [], []>} : vector<16x32xbf16>, vector<32x32xbf16>, vector<16x32xf32> -> vector<16x32xf32>
    %c1_106 = arith.constant 1 : index
    %c0_107 = arith.constant 0 : index
    %c0_108 = arith.constant 0 : index
    %196 = vector.load %arg9[%c1_106, %c0_107, %c0_108] : memref<2x1x32xf32, #tpu.memory_space<vmem>>, vector<1x1x32xf32>
    %197 = vector.shape_cast %196 : vector<1x1x32xf32> to vector<1x32xf32>
    %198 = vector.broadcast %197 : vector<1x32xf32> to vector<16x32xf32>
    %199 = arith.addf %195, %198 : vector<16x32xf32>
    %200 = vector.extract_strided_slice %185 {offsets = [0, 0], sizes = [16, 16], strides = [1, 1]} : vector<16x32xf32> to vector<16x16xf32>
    %201 = vector.extract_strided_slice %192 {offsets = [0, 0], sizes = [16, 16], strides = [1, 1]} : vector<16x32xf32> to vector<16x16xf32>
    %202 = vector.extract_strided_slice %199 {offsets = [0, 0], sizes = [16, 16], strides = [1, 1]} : vector<16x32xf32> to vector<16x16xf32>
    %203 = tpu.transpose %201, [1, 0] : vector<16x16xf32> -> vector<16x16xf32>
    %cst_109 = arith.constant dense<0.000000e+00> : vector<16x16xf32>
    %204 = tpu.matmul %200, %203, %cst_109 {dimension_numbers = #tpu.dot_dimension_numbers<[1], [0], [0], [1], [0, 0, 1, 1], [], []>} : vector<16x16xf32>, vector<16x16xf32>, vector<16x16xf32> -> vector<16x16xf32>
    %cst_110 = arith.constant 2.500000e-01 : f32
    %205 = vector.broadcast %cst_110 : f32 to vector<16x16xf32>
    %206 = arith.mulf %204, %205 : vector<16x16xf32>
    %207 = arith.addf %206, %25 : vector<16x16xf32>
    %cst_111 = arith.constant dense<0xFF800000> : vector<16xf32>
    %208 = vector.multi_reduction <maximumf>, %207, %cst_111 [1] : vector<16x16xf32> to vector<16xf32>
    %209 = vector.shape_cast %208 : vector<16xf32> to vector<16x1xf32>
    %210 = vector.broadcast %209 : vector<16x1xf32> to vector<16x16xf32>
    %211 = arith.subf %207, %210 : vector<16x16xf32>
    %212 = math.exp %211 : vector<16x16xf32>
    %cst_112 = arith.constant dense<0.000000e+00> : vector<16xf32>
    %213 = vector.multi_reduction <add>, %212, %cst_112 [1] : vector<16x16xf32> to vector<16xf32>
    %214 = vector.shape_cast %213 : vector<16xf32> to vector<16x1xf32>
    %215 = tpu.reciprocal %214 {approx = true} : vector<16x1xf32> -> vector<16x1xf32>
    %216 = vector.broadcast %215 : vector<16x1xf32> to vector<16x16xf32>
    %217 = arith.mulf %212, %216 : vector<16x16xf32>
    %cst_113 = arith.constant dense<0.000000e+00> : vector<16x16xf32>
    %218 = tpu.matmul %217, %202, %cst_113 {dimension_numbers = #tpu.dot_dimension_numbers<[1], [0], [0], [1], [0, 0, 1, 1], [], []>} : vector<16x16xf32>, vector<16x16xf32>, vector<16x16xf32> -> vector<16x16xf32>
    %219 = vector.extract_strided_slice %185 {offsets = [0, 16], sizes = [16, 16], strides = [1, 1]} : vector<16x32xf32> to vector<16x16xf32>
    %220 = vector.extract_strided_slice %192 {offsets = [0, 16], sizes = [16, 16], strides = [1, 1]} : vector<16x32xf32> to vector<16x16xf32>
    %221 = vector.extract_strided_slice %199 {offsets = [0, 16], sizes = [16, 16], strides = [1, 1]} : vector<16x32xf32> to vector<16x16xf32>
    %222 = tpu.transpose %220, [1, 0] : vector<16x16xf32> -> vector<16x16xf32>
    %cst_114 = arith.constant dense<0.000000e+00> : vector<16x16xf32>
    %223 = tpu.matmul %219, %222, %cst_114 {dimension_numbers = #tpu.dot_dimension_numbers<[1], [0], [0], [1], [0, 0, 1, 1], [], []>} : vector<16x16xf32>, vector<16x16xf32>, vector<16x16xf32> -> vector<16x16xf32>
    %cst_115 = arith.constant 2.500000e-01 : f32
    %224 = vector.broadcast %cst_115 : f32 to vector<16x16xf32>
    %225 = arith.mulf %223, %224 : vector<16x16xf32>
    %226 = arith.addf %225, %25 : vector<16x16xf32>
    %cst_116 = arith.constant dense<0xFF800000> : vector<16xf32>
    %227 = vector.multi_reduction <maximumf>, %226, %cst_116 [1] : vector<16x16xf32> to vector<16xf32>
    %228 = vector.shape_cast %227 : vector<16xf32> to vector<16x1xf32>
    %229 = vector.broadcast %228 : vector<16x1xf32> to vector<16x16xf32>
    %230 = arith.subf %226, %229 : vector<16x16xf32>
    %231 = math.exp %230 : vector<16x16xf32>
    %cst_117 = arith.constant dense<0.000000e+00> : vector<16xf32>
    %232 = vector.multi_reduction <add>, %231, %cst_117 [1] : vector<16x16xf32> to vector<16xf32>
    %233 = vector.shape_cast %232 : vector<16xf32> to vector<16x1xf32>
    %234 = tpu.reciprocal %233 {approx = true} : vector<16x1xf32> -> vector<16x1xf32>
    %235 = vector.broadcast %234 : vector<16x1xf32> to vector<16x16xf32>
    %236 = arith.mulf %231, %235 : vector<16x16xf32>
    %cst_118 = arith.constant dense<0.000000e+00> : vector<16x16xf32>
    %237 = tpu.matmul %236, %221, %cst_118 {dimension_numbers = #tpu.dot_dimension_numbers<[1], [0], [0], [1], [0, 0, 1, 1], [], []>} : vector<16x16xf32>, vector<16x16xf32>, vector<16x16xf32> -> vector<16x16xf32>
    %238 = tpu.concatenate %218, %237 in 1 : vector<16x16xf32>, vector<16x16xf32> -> vector<16x32xf32>
    %239 = arith.truncf %238 : vector<16x32xf32> to vector<16x32xbf16>
    %c1_119 = arith.constant 1 : index
    %c0_120 = arith.constant 0 : index
    %c0_121 = arith.constant 0 : index
    %240 = vector.load %arg10[%c1_119, %c0_120, %c0_121] : memref<2x32x32xbf16, #tpu.memory_space<vmem>>, vector<1x32x32xbf16>
    %241 = vector.shape_cast %240 : vector<1x32x32xbf16> to vector<32x32xbf16>
    %cst_122 = arith.constant dense<0.000000e+00> : vector<16x32xf32>
    %242 = tpu.matmul %239, %241, %cst_122 {dimension_numbers = #tpu.dot_dimension_numbers<[1], [0], [0], [1], [0, 0, 1, 1], [], []>} : vector<16x32xbf16>, vector<32x32xbf16>, vector<16x32xf32> -> vector<16x32xf32>
    %c1_123 = arith.constant 1 : index
    %c0_124 = arith.constant 0 : index
    %c0_125 = arith.constant 0 : index
    %243 = vector.load %arg11[%c1_123, %c0_124, %c0_125] : memref<2x1x32xf32, #tpu.memory_space<vmem>>, vector<1x1x32xf32>
    %244 = vector.shape_cast %243 : vector<1x1x32xf32> to vector<1x32xf32>
    %245 = vector.broadcast %244 : vector<1x32xf32> to vector<16x32xf32>
    %246 = arith.addf %242, %245 : vector<16x32xf32>
    %247 = arith.addf %177, %246 : vector<16x32xf32>
    %c1_126 = arith.constant 1 : index
    %c0_127 = arith.constant 0 : index
    %c0_128 = arith.constant 0 : index
    %248 = vector.load %arg12[%c1_126, %c0_127, %c0_128] : memref<2x1x32xf32, #tpu.memory_space<vmem>>, vector<1x1x32xf32>
    %249 = vector.shape_cast %248 : vector<1x1x32xf32> to vector<1x32xf32>
    %c1_129 = arith.constant 1 : index
    %c0_130 = arith.constant 0 : index
    %c0_131 = arith.constant 0 : index
    %250 = vector.load %arg13[%c1_129, %c0_130, %c0_131] : memref<2x1x32xf32, #tpu.memory_space<vmem>>, vector<1x1x32xf32>
    %251 = vector.shape_cast %250 : vector<1x1x32xf32> to vector<1x32xf32>
    %cst_132 = arith.constant dense<0.000000e+00> : vector<16xf32>
    %252 = vector.multi_reduction <add>, %247, %cst_132 [1] : vector<16x32xf32> to vector<16xf32>
    %253 = vector.shape_cast %252 : vector<16xf32> to vector<16x1xf32>
    %cst_133 = arith.constant 3.200000e+01 : f32
    %254 = vector.broadcast %cst_133 : f32 to vector<16x1xf32>
    %255 = arith.divf %253, %254 : vector<16x1xf32>
    %256 = vector.broadcast %255 : vector<16x1xf32> to vector<16x32xf32>
    %257 = arith.subf %247, %256 : vector<16x32xf32>
    %258 = arith.mulf %257, %257 : vector<16x32xf32>
    %cst_134 = arith.constant dense<0.000000e+00> : vector<16xf32>
    %259 = vector.multi_reduction <add>, %258, %cst_134 [1] : vector<16x32xf32> to vector<16xf32>
    %260 = vector.shape_cast %259 : vector<16xf32> to vector<16x1xf32>
    %cst_135 = arith.constant 3.200000e+01 : f32
    %261 = vector.broadcast %cst_135 : f32 to vector<16x1xf32>
    %262 = arith.divf %260, %261 : vector<16x1xf32>
    %263 = vector.broadcast %255 : vector<16x1xf32> to vector<16x32xf32>
    %264 = arith.subf %247, %263 : vector<16x32xf32>
    %cst_136 = arith.constant 9.99999996E-13 : f32
    %265 = vector.broadcast %cst_136 : f32 to vector<16x1xf32>
    %266 = arith.addf %262, %265 : vector<16x1xf32>
    %267 = math.rsqrt %266 : vector<16x1xf32>
    %268 = vector.broadcast %267 : vector<16x1xf32> to vector<16x32xf32>
    %269 = arith.mulf %264, %268 : vector<16x32xf32>
    %270 = vector.broadcast %249 : vector<1x32xf32> to vector<16x32xf32>
    %271 = arith.mulf %269, %270 : vector<16x32xf32>
    %272 = vector.broadcast %251 : vector<1x32xf32> to vector<16x32xf32>
    %273 = arith.addf %271, %272 : vector<16x32xf32>
    %274 = arith.truncf %273 : vector<16x32xf32> to vector<16x32xbf16>
    %c1_137 = arith.constant 1 : index
    %c0_138 = arith.constant 0 : index
    %c0_139 = arith.constant 0 : index
    %275 = vector.load %arg14[%c1_137, %c0_138, %c0_139] : memref<2x32x64xbf16, #tpu.memory_space<vmem>>, vector<1x32x64xbf16>
    %276 = vector.shape_cast %275 : vector<1x32x64xbf16> to vector<32x64xbf16>
    %cst_140 = arith.constant dense<0.000000e+00> : vector<16x64xf32>
    %277 = tpu.matmul %274, %276, %cst_140 {dimension_numbers = #tpu.dot_dimension_numbers<[1], [0], [0], [1], [0, 0, 1, 1], [], []>} : vector<16x32xbf16>, vector<32x64xbf16>, vector<16x64xf32> -> vector<16x64xf32>
    %c1_141 = arith.constant 1 : index
    %c0_142 = arith.constant 0 : index
    %c0_143 = arith.constant 0 : index
    %278 = vector.load %arg15[%c1_141, %c0_142, %c0_143] : memref<2x1x64xf32, #tpu.memory_space<vmem>>, vector<1x1x64xf32>
    %279 = vector.shape_cast %278 : vector<1x1x64xf32> to vector<1x64xf32>
    %280 = vector.broadcast %279 : vector<1x64xf32> to vector<16x64xf32>
    %281 = arith.addf %277, %280 : vector<16x64xf32>
    %cst_144 = arith.constant 5.000000e-01 : f32
    %282 = vector.broadcast %cst_144 : f32 to vector<16x64xf32>
    %283 = arith.mulf %282, %281 : vector<16x64xf32>
    %cst_145 = arith.constant 4.471500e-02 : f32
    %284 = vector.broadcast %cst_145 : f32 to vector<16x64xf32>
    %285 = arith.mulf %284, %281 : vector<16x64xf32>
    %286 = arith.mulf %285, %281 : vector<16x64xf32>
    %287 = arith.mulf %286, %281 : vector<16x64xf32>
    %288 = arith.addf %281, %287 : vector<16x64xf32>
    %cst_146 = arith.constant 0.797884583 : f32
    %289 = vector.broadcast %cst_146 : f32 to vector<16x64xf32>
    %290 = arith.mulf %289, %288 : vector<16x64xf32>
    %291 = math.tanh %290 : vector<16x64xf32>
    %cst_147 = arith.constant 1.000000e+00 : f32
    %292 = vector.broadcast %cst_147 : f32 to vector<16x64xf32>
    %293 = arith.addf %292, %291 : vector<16x64xf32>
    %294 = arith.mulf %283, %293 : vector<16x64xf32>
    %295 = arith.truncf %294 : vector<16x64xf32> to vector<16x64xbf16>
    %c1_148 = arith.constant 1 : index
    %c0_149 = arith.constant 0 : index
    %c0_150 = arith.constant 0 : index
    %296 = vector.load %arg16[%c1_148, %c0_149, %c0_150] : memref<2x64x32xbf16, #tpu.memory_space<vmem>>, vector<1x64x32xbf16>
    %297 = vector.shape_cast %296 : vector<1x64x32xbf16> to vector<64x32xbf16>
    %cst_151 = arith.constant dense<0.000000e+00> : vector<16x32xf32>
    %298 = tpu.matmul %295, %297, %cst_151 {dimension_numbers = #tpu.dot_dimension_numbers<[1], [0], [0], [1], [0, 0, 1, 1], [], []>} : vector<16x64xbf16>, vector<64x32xbf16>, vector<16x32xf32> -> vector<16x32xf32>
    %c1_152 = arith.constant 1 : index
    %c0_153 = arith.constant 0 : index
    %c0_154 = arith.constant 0 : index
    %299 = vector.load %arg17[%c1_152, %c0_153, %c0_154] : memref<2x1x32xf32, #tpu.memory_space<vmem>>, vector<1x1x32xf32>
    %300 = vector.shape_cast %299 : vector<1x1x32xf32> to vector<1x32xf32>
    %301 = vector.broadcast %300 : vector<1x32xf32> to vector<16x32xf32>
    %302 = arith.addf %298, %301 : vector<16x32xf32>
    %303 = arith.addf %273, %302 : vector<16x32xf32>
    %c1_155 = arith.constant 1 : index
    %c0_156 = arith.constant 0 : index
    %c0_157 = arith.constant 0 : index
    %304 = vector.load %arg18[%c1_155, %c0_156, %c0_157] : memref<2x1x32xf32, #tpu.memory_space<vmem>>, vector<1x1x32xf32>
    %305 = vector.shape_cast %304 : vector<1x1x32xf32> to vector<1x32xf32>
    %c1_158 = arith.constant 1 : index
    %c0_159 = arith.constant 0 : index
    %c0_160 = arith.constant 0 : index
    %306 = vector.load %arg19[%c1_158, %c0_159, %c0_160] : memref<2x1x32xf32, #tpu.memory_space<vmem>>, vector<1x1x32xf32>
    %307 = vector.shape_cast %306 : vector<1x1x32xf32> to vector<1x32xf32>
    %cst_161 = arith.constant dense<0.000000e+00> : vector<16xf32>
    %308 = vector.multi_reduction <add>, %303, %cst_161 [1] : vector<16x32xf32> to vector<16xf32>
    %309 = vector.shape_cast %308 : vector<16xf32> to vector<16x1xf32>
    %cst_162 = arith.constant 3.200000e+01 : f32
    %310 = vector.broadcast %cst_162 : f32 to vector<16x1xf32>
    %311 = arith.divf %309, %310 : vector<16x1xf32>
    %312 = vector.broadcast %311 : vector<16x1xf32> to vector<16x32xf32>
    %313 = arith.subf %303, %312 : vector<16x32xf32>
    %314 = arith.mulf %313, %313 : vector<16x32xf32>
    %cst_163 = arith.constant dense<0.000000e+00> : vector<16xf32>
    %315 = vector.multi_reduction <add>, %314, %cst_163 [1] : vector<16x32xf32> to vector<16xf32>
    %316 = vector.shape_cast %315 : vector<16xf32> to vector<16x1xf32>
    %cst_164 = arith.constant 3.200000e+01 : f32
    %317 = vector.broadcast %cst_164 : f32 to vector<16x1xf32>
    %318 = arith.divf %316, %317 : vector<16x1xf32>
    %319 = vector.broadcast %311 : vector<16x1xf32> to vector<16x32xf32>
    %320 = arith.subf %303, %319 : vector<16x32xf32>
    %cst_165 = arith.constant 9.99999996E-13 : f32
    %321 = vector.broadcast %cst_165 : f32 to vector<16x1xf32>
    %322 = arith.addf %318, %321 : vector<16x1xf32>
    %323 = math.rsqrt %322 : vector<16x1xf32>
    %324 = vector.broadcast %323 : vector<16x1xf32> to vector<16x32xf32>
    %325 = arith.mulf %320, %324 : vector<16x32xf32>
    %326 = vector.broadcast %305 : vector<1x32xf32> to vector<16x32xf32>
    %327 = arith.mulf %325, %326 : vector<16x32xf32>
    %328 = vector.broadcast %307 : vector<1x32xf32> to vector<16x32xf32>
    %329 = arith.addf %327, %328 : vector<16x32xf32>
    %330 = arith.truncf %329 : vector<16x32xf32> to vector<16x32xbf16>
    %c0_166 = arith.constant 0 : index
    %c0_167 = arith.constant 0 : index
    %331 = vector.load %arg20[%c0_166, %c0_167] : memref<32x32xbf16, #tpu.memory_space<vmem>>, vector<32x32xbf16>
    %cst_168 = arith.constant dense<0.000000e+00> : vector<16x32xf32>
    %332 = tpu.matmul %330, %331, %cst_168 {dimension_numbers = #tpu.dot_dimension_numbers<[1], [0], [0], [1], [0, 0, 1, 1], [], []>} : vector<16x32xbf16>, vector<32x32xbf16>, vector<16x32xf32> -> vector<16x32xf32>
    %c0_169 = arith.constant 0 : index
    %c0_170 = arith.constant 0 : index
    %333 = vector.load %arg21[%c0_169, %c0_170] : memref<1x32xf32, #tpu.memory_space<vmem>>, vector<1x32xf32>
    %334 = vector.broadcast %333 : vector<1x32xf32> to vector<16x32xf32>
    %335 = arith.addf %332, %334 : vector<16x32xf32>
    %336 = math.tanh %335 : vector<16x32xf32>
    %337 = arith.truncf %336 : vector<16x32xf32> to vector<16x32xbf16>
    %c0_171 = arith.constant 0 : index
    %c0_172 = arith.constant 0 : index
    %338 = vector.load %arg22[%c0_171, %c0_172] : memref<32x128xbf16, #tpu.memory_space<vmem>>, vector<32x128xbf16>
    %cst_173 = arith.constant dense<0.000000e+00> : vector<16x128xf32>
    %339 = tpu.matmul %337, %338, %cst_173 {dimension_numbers = #tpu.dot_dimension_numbers<[1], [0], [0], [1], [0, 0, 1, 1], [], []>} : vector<16x32xbf16>, vector<32x128xbf16>, vector<16x128xf32> -> vector<16x128xf32>
    %c0_174 = arith.constant 0 : index
    %c0_175 = arith.constant 0 : index
    %340 = vector.load %arg23[%c0_174, %c0_175] : memref<1x128xf32, #tpu.memory_space<vmem>>, vector<1x128xf32>
    %341 = vector.broadcast %340 : vector<1x128xf32> to vector<16x128xf32>
    %342 = arith.addf %339, %341 : vector<16x128xf32>
    %c0_176 = arith.constant 0 : index
    %c0_177 = arith.constant 0 : index
    %343 = vector.load %arg24[%c0_176, %c0_177] : memref<16x128xf32, #tpu.memory_space<vmem>>, vector<16x128xf32>
    tpu.vector_store %arg24[%c0_176, %c0_177], %342 {strides = array<i32>} : memref<16x128xf32, #tpu.memory_space<vmem>>, vector<16x128xf32>,
    return
  }
}

</mosaic_0001>

<llo_original>
// kernel: mul.8
$region0: #{mul.8}
  %s0 = inlined_call_operand.vmem [shape: f32[2,8], index: 0, kind: input, shape index: {}]
  %s1 = inlined_call_operand.vmem [shape: f32[16], index: 1, kind: output, shape index: {}]
  $region1: #{mul.8} parent=0
    #allocation0 [shape = 'u8[4096]{0}', space=vmem, size = 0x1000, scoped, tag = 'scoped mem for output reshape']
    #allocation1 [shape = 'u8[4096]{0}', space=vmem, size = 0x1000, scoped, tag = 'scoped mem for input reshape']
    %s3 = sshllo.u32 0, 2
    %v4 = vld [vmem:[%s0] sm:%s3]
    %5 = vst [vmem:[#allocation1] sm:%s3] %v4
    %v6 = vld [vmem:[#allocation1] sm:$0x1]
    %vm7 = vcmask 64512
    %8 = vst.msk [vmem:[#allocation0] sm:$0x1] %vm7, %v6
    %s9 = scalar_lea.vmem [#allocation1], 1
    %v10 = vld [vmem:[%s9] sm:$0x1]
    %11 = vrot.lane.b32.xlu0 %v10, 8
    %v12 = vpop.permute.xlu0 %11
    %vm13 = vcmask 130112
    %14 = vst.msk [vmem:[#allocation0] sm:$0x1] %vm13, %v12
    %s16 = sshllo.u32 0, 1
    %v18 = vld [vmem:[#allocation0] sm:%s16]
    %s19 = sshllo.u32 0, 1
    %20 = vst [vmem:[%s1] sm:%s19] %v18

// kernel: sentiment_forward.1
$region0: #{sentiment_forward.1}
  #allocation0 [shape = 'u32[]', space=smem, size = 0x4, offset = 0x4, fixed_abs, tag = 'smem constant byte address 0x4 - core index']
  #allocation1 [shape = 'u32[144,128]{1,0:T(1,128)}', space=vmem, size = 0x12000, scoped, tag = 'internal scratch']
  %s0 = inlined_call_operand.vmem [shape: f32[16,32], index: 0, kind: input, shape index: {}]
  %s1 = inlined_call_operand.vmem [shape: f32[16,16], index: 1, kind: input, shape index: {}]
  %s2 = inlined_call_operand.vmem [shape: f32[1,32], index: 2, kind: input, shape index: {}]
  %s3 = inlined_call_operand.vmem [shape: f32[1,32], index: 3, kind: input, shape index: {}]
  %s4 = inlined_call_operand.vmem [shape: bf16[2,32,32], index: 4, kind: input, shape index: {}]
  %s5 = inlined_call_operand.vmem [shape: f32[2,1,32], index: 5, kind: input, shape index: {}]
  %s6 = inlined_call_operand.vmem [shape: bf16[2,32,32], index: 6, kind: input, shape index: {}]
  %s7 = inlined_call_operand.vmem [shape: f32[2,1,32], index: 7, kind: input, shape index: {}]
  %s8 = inlined_call_operand.vmem [shape: bf16[2,32,32], index: 8, kind: input, shape index: {}]
  %s9 = inlined_call_operand.vmem [shape: f32[2,1,32], index: 9, kind: input, shape index: {}]
  %s10 = inlined_call_operand.vmem [shape: bf16[2,32,32], index: 10, kind: input, shape index: {}]
  %s11 = inlined_call_operand.vmem [shape: f32[2,1,32], index: 11, kind: input, shape index: {}]
  %s12 = inlined_call_operand.vmem [shape: f32[2,1,32], index: 12, kind: input, shape index: {}]
  %s13 = inlined_call_operand.vmem [shape: f32[2,1,32], index: 13, kind: input, shape index: {}]
  %s14 = inlined_call_operand.vmem [shape: bf16[2,32,64], index: 14, kind: input, shape index: {}]
  %s15 = inlined_call_operand.vmem [shape: f32[2,1,64], index: 15, kind: input, shape index: {}]
  %s16 = inlined_call_operand.vmem [shape: bf16[2,64,32], index: 16, kind: input, shape index: {}]
  %s17 = inlined_call_operand.vmem [shape: f32[2,1,32], index: 17, kind: input, shape index: {}]
  %s18 = inlined_call_operand.vmem [shape: f32[2,1,32], index: 18, kind: input, shape index: {}]
  %s19 = inlined_call_operand.vmem [shape: f32[2,1,32], index: 19, kind: input, shape index: {}]
  %s20 = inlined_call_operand.vmem [shape: bf16[32,32], index: 20, kind: input, shape index: {}]
  %s21 = inlined_call_operand.vmem [shape: f32[1,32], index: 21, kind: input, shape index: {}]
  %s22 = inlined_call_operand.vmem [shape: bf16[32,128], index: 22, kind: input, shape index: {}]
  %s23 = inlined_call_operand.vmem [shape: f32[1,128], index: 23, kind: input, shape index: {}]
  %s24 = inlined_call_operand.vmem [shape: f32[16,128], index: 24, kind: output, shape index: {}]
  %s25 = sld [smem:[#allocation0]]
  $region106: #{sentiment_forward.1} parent=0
    _
  %s27 = ssub.s32 1, %s25
  %s28 = scalar_select 0, %s27, %s25
  // Predicated region
  $region2: #{sentiment_forward.1} parent=0 // pred_check
    _
  $region3: #{sentiment_forward.1} parent=0 // pred_check_branch
    %30 = sbr.rel (0) target = $region5
  $region4: #{sentiment_forward.1} parent=0 // pred_region
    _
  $region5: #{sentiment_forward.1} parent=0 // pred_fallthru
    _
  // Predicated region
  $region6: #{sentiment_forward.1} parent=0 // pred_check
    _
  $region7: #{sentiment_forward.1} parent=0 // pred_check_branch
    %32 = sbr.rel (0) target = $region9
  $region8: #{sentiment_forward.1} parent=0 // pred_region
    _
  $region9: #{sentiment_forward.1} parent=0 // pred_fallthru
    _
  // Predicated region
  $region10: #{sentiment_forward.1} parent=0 // pred_check
    _
  $region11: #{sentiment_forward.1} parent=0 // pred_check_branch
    %34 = sbr.rel (0) target = $region13
  $region12: #{sentiment_forward.1} parent=0 // pred_region
    _
  $region13: #{sentiment_forward.1} parent=0 // pred_fallthru
    _
  // Predicated region
  $region14: #{sentiment_forward.1} parent=0 // pred_check
    _
  $region15: #{sentiment_forward.1} parent=0 // pred_check_branch
    %36 = sbr.rel (0) target = $region17
  $region16: #{sentiment_forward.1} parent=0 // pred_region
    _
  $region17: #{sentiment_forward.1} parent=0 // pred_fallthru
    _
  // Predicated region
  $region18: #{sentiment_forward.1} parent=0 // pred_check
    _
  $region19: #{sentiment_forward.1} parent=0 // pred_check_branch
    %38 = sbr.rel (0) target = $region21
  $region20: #{sentiment_forward.1} parent=0 // pred_region
    _
  $region21: #{sentiment_forward.1} parent=0 // pred_fallthru
    _
  // Predicated region
  $region22: #{sentiment_forward.1} parent=0 // pred_check
    _
  $region23: #{sentiment_forward.1} parent=0 // pred_check_branch
    %40 = sbr.rel (0) target = $region25
  $region24: #{sentiment_forward.1} parent=0 // pred_region
    _
  $region25: #{sentiment_forward.1} parent=0 // pred_fallthru
    _
  // Predicated region
  $region26: #{sentiment_forward.1} parent=0 // pred_check
    _
  $region27: #{sentiment_forward.1} parent=0 // pred_check_branch
    %42 = sbr.rel (0) target = $region29
  $region28: #{sentiment_forward.1} parent=0 // pred_region
    _
  $region29: #{sentiment_forward.1} parent=0 // pred_fallthru
    _
  // Predicated region
  $region30: #{sentiment_forward.1} parent=0 // pred_check
    _
  $region31: #{sentiment_forward.1} parent=0 // pred_check_branch
    %44 = sbr.rel (0) target = $region33
  $region32: #{sentiment_forward.1} parent=0 // pred_region
    _
  $region33: #{sentiment_forward.1} parent=0 // pred_fallthru
    _
  // Predicated region
  $region34: #{sentiment_forward.1} parent=0 // pred_check
    _
  $region35: #{sentiment_forward.1} parent=0 // pred_check_branch
    %46 = sbr.rel (0) target = $region37
  $region36: #{sentiment_forward.1} parent=0 // pred_region
    _
  $region37: #{sentiment_forward.1} parent=0 // pred_fallthru
    _
  // Predicated region
  $region38: #{sentiment_forward.1} parent=0 // pred_check
    _
  $region39: #{sentiment_forward.1} parent=0 // pred_check_branch
    %48 = sbr.rel (0) target = $region41
  $region40: #{sentiment_forward.1} parent=0 // pred_region
    _
  $region41: #{sentiment_forward.1} parent=0 // pred_fallthru
    _
  // Predicated region
  $region42: #{sentiment_forward.1} parent=0 // pred_check
    _
  $region43: #{sentiment_forward.1} parent=0 // pred_check_branch
    %50 = sbr.rel (0) target = $region45
  $region44: #{sentiment_forward.1} parent=0 // pred_region
    _
  $region45: #{sentiment_forward.1} parent=0 // pred_fallthru
    _
  // Predicated region
  $region46: #{sentiment_forward.1} parent=0 // pred_check
    _
  $region47: #{sentiment_forward.1} parent=0 // pred_check_branch
    %52 = sbr.rel (0) target = $region49
  $region48: #{sentiment_forward.1} parent=0 // pred_region
    _
  $region49: #{sentiment_forward.1} parent=0 // pred_fallthru
    _
  // Predicated region
  $region50: #{sentiment_forward.1} parent=0 // pred_check
    _
  $region51: #{sentiment_forward.1} parent=0 // pred_check_branch
    %54 = sbr.rel (0) target = $region53
  $region52: #{sentiment_forward.1} parent=0 // pred_region
    _
  $region53: #{sentiment_forward.1} parent=0 // pred_fallthru
    _
  // Predicated region
  $region54: #{sentiment_forward.1} parent=0 // pred_check
    _
  $region55: #{sentiment_forward.1} parent=0 // pred_check_branch
    %56 = sbr.rel (0) target = $region57
  $region56: #{sentiment_forward.1} parent=0 // pred_region
    _
  $region57: #{sentiment_forward.1} parent=0 // pred_fallthru
    _
  // Predicated region
  $region58: #{sentiment_forward.1} parent=0 // pred_check
    _
  $region59: #{sentiment_forward.1} parent=0 // pred_check_branch
    %58 = sbr.rel (0) target = $region61
  $region60: #{sentiment_forward.1} parent=0 // pred_region
    _
  $region61: #{sentiment_forward.1} parent=0 // pred_fallthru
    _
  // Predicated region
  $region62: #{sentiment_forward.1} parent=0 // pred_check
    _
  $region63: #{sentiment_forward.1} parent=0 // pred_check_branch
    %60 = sbr.rel (0) target = $region65
  $region64: #{sentiment_forward.1} parent=0 // pred_region
    _
  $region65: #{sentiment_forward.1} parent=0 // pred_fallthru
    _
  // Predicated region
  $region66: #{sentiment_forward.1} parent=0 // pred_check
    _
  $region67: #{sentiment_forward.1} parent=0 // pred_check_branch
    %62 = sbr.rel (0) target = $region69
  $region68: #{sentiment_forward.1} parent=0 // pred_region
    _
  $region69: #{sentiment_forward.1} parent=0 // pred_fallthru
    _
  // Predicated region
  $region70: #{sentiment_forward.1} parent=0 // pred_check
    _
  $region71: #{sentiment_forward.1} parent=0 // pred_check_branch
    %64 = sbr.rel (0) target = $region73
  $region72: #{sentiment_forward.1} parent=0 // pred_region
    _
  $region73: #{sentiment_forward.1} parent=0 // pred_fallthru
    _
  // Predicated region
  $region74: #{sentiment_forward.1} parent=0 // pred_check
    _
  $region75: #{sentiment_forward.1} parent=0 // pred_check_branch
    %66 = sbr.rel (0) target = $region77
  $region76: #{sentiment_forward.1} parent=0 // pred_region
    _
  $region77: #{sentiment_forward.1} parent=0 // pred_fallthru
    _
  // Predicated region
  $region78: #{sentiment_forward.1} parent=0 // pred_check
    _
  $region79: #{sentiment_forward.1} parent=0 // pred_check_branch
    %68 = sbr.rel (0) target = $region81
  $region80: #{sentiment_forward.1} parent=0 // pred_region
    _
  $region81: #{sentiment_forward.1} parent=0 // pred_fallthru
    _
  // Predicated region
  $region82: #{sentiment_forward.1} parent=0 // pred_check
    _
  $region83: #{sentiment_forward.1} parent=0 // pred_check_branch
    %70 = sbr.rel (0) target = $region85
  $region84: #{sentiment_forward.1} parent=0 // pred_region
    _
  $region85: #{sentiment_forward.1} parent=0 // pred_fallthru
    _
  // Predicated region
  $region86: #{sentiment_forward.1} parent=0 // pred_check
    _
  $region87: #{sentiment_forward.1} parent=0 // pred_check_branch
    %72 = sbr.rel (0) target = $region89
  $region88: #{sentiment_forward.1} parent=0 // pred_region
    _
  $region89: #{sentiment_forward.1} parent=0 // pred_fallthru
    _
  // Predicated region
  $region90: #{sentiment_forward.1} parent=0 // pred_check
    _
  $region91: #{sentiment_forward.1} parent=0 // pred_check_branch
    %74 = sbr.rel (0) target = $region93
  $region92: #{sentiment_forward.1} parent=0 // pred_region
    _
  $region93: #{sentiment_forward.1} parent=0 // pred_fallthru
    _
  // Predicated region
  $region94: #{sentiment_forward.1} parent=0 // pred_check
    _
  $region95: #{sentiment_forward.1} parent=0 // pred_check_branch
    %76 = sbr.rel (0) target = $region97
  $region96: #{sentiment_forward.1} parent=0 // pred_region
    _
  $region97: #{sentiment_forward.1} parent=0 // pred_fallthru
    _
  %v78 = vld [vmem:[%s0] sm:$0xff]
  %v79 = vld [vmem:[%s0 + $0x8] sm:$0xff]
  %v80 = vld [vmem:[%s2] sm:$0x1]
  %v81 = vld [vmem:[%s3] sm:$0x1]
  %vm82 = vcmask 261120
  %v83 = vsel %vm82, %v78, 0.0
  %84 = vadd.xlane.f32.xlu0 %v83
  %v85 = vpop.xlane.xlu0 %84
  %v86 = vsel %vm82, %v79, 0.0
  %87 = vadd.xlane.f32.xlu0 %v86
  %v88 = vpop.xlane.xlu0 %87
  %v89 = vrcp.pop 32.0
  %v90 = vmul.f32 %v85, %v89
  %v91 = vmul.f32 %v88, %v89
  %v92 = vsub.f32 %v78, %v90
  %v93 = vsub.f32 %v79, %v91
  %v94 = vmul.f32 %v92, %v92
  %v95 = vmul.f32 %v93, %v93
  %v96 = vsel %vm82, %v94, 0.0
  %97 = vadd.xlane.f32.xlu0 %v96
  %v98 = vpop.xlane.xlu0 %97
  %v99 = vsel %vm82, %v95, 0.0
  %100 = vadd.xlane.f32.xlu0 %v99
  %v101 = vpop.xlane.xlu0 %100
  %v102 = vmul.f32 %v98, %v89
  %v103 = vmul.f32 %v101, %v89
  %v104 = vadd.f32 %v102, 1e-12
  %v105 = vadd.f32 %v103, 1e-12
  %v106 = vrsqrt.pop %v104
  %v107 = vrsqrt.pop %v105
  %v108 = vmul.f32 %v92, %v106
  %v109 = vmul.f32 %v93, %v107
  %v111 = vlaneseq
  %v112 = vshrl.u32 %v111, 7
  %v113 = vsub.s32 0, %v112
  %v114 = vrot.slane %v80, %v113
  %v116 = vmul.f32 %v108, %v114
  %v117 = vmul.f32 %v109, %v114
  %v119 = vlaneseq
  %v120 = vshrl.u32 %v119, 7
  %v121 = vsub.s32 0, %v120
  %v122 = vrot.slane %v81, %v121
  %v124 = vadd.f32 %v116, %v122
  %v125 = vadd.f32 %v117, %v122
  %v126 = vld [vmem:[%s1] sm:$0xff]
  %v127 = vld [vmem:[%s1 + $0x8] sm:$0xff]
  %v128 = vpack.c.bf16 %v125, %v124
  %v129 = vld [vmem:[%s4] sm:$0xf]
  %v130 = vld [vmem:[%s4 + $0x4] sm:$0xf]
  %v131 = vld [vmem:[%s4 + $0x8] sm:$0xf]
  %v132 = vld [vmem:[%s4 + $0xc] sm:$0xf]
  %v133 = vld [vmem:[%s5] sm:$0x1]
  %v135 = vlaneseq
  %v136 = vshrl.u32 %v135, 7
  %v137 = vsub.s32 0, %v136
  %v138 = vrot.slane %v133, %v137
  %v144 = vunpack.c.l.b16 %v129
  %v145 = vunpack.c.l.b16 %v130
  %v146 = vunpack.c.l.b16 %v131
  %v147 = vunpack.c.l.b16 %v132
  %v148 = vpack.c.b16 %v145, %v144
  %v149 = vpack.c.b16 %v147, %v146
  %v153 = vsel %vm82, %v128, 0
  %155 = vmatprep.subr.bf16.mxu0 0
  %156 = vmatpush1.bf16.msra.mxu0 %v148
  %157 = vmatprep.subr.bf16.mxu0 0
  %158 = vmatpush1.bf16.msra.mxu0 %v149
  %159 = vmatprep.subr.bf16.mxu0 0
  %160 = vmatpush1.bf16.msra.mxu0 0
  %161 = vmatprep.subr.bf16.mxu0 0
  %162 = vmatpush1.bf16.msra.mxu0 0
  %163 = vmatprep.subr.bf16.mxu0 0
  %164 = vmatpush1.bf16.msra.mxu0 0
  %165 = vmatprep.subr.bf16.mxu0 0
  %166 = vmatpush1.bf16.msra.mxu0 0
  %167 = vmatprep.subr.bf16.mxu0 0
  %168 = vmatpush1.bf16.msra.mxu0 0
  %169 = vmatprep.subr.bf16.mxu0 0
  %170 = vmatpush1.bf16.msra.mxu0 0
  %171 = vmatprep.subr.bf16.mxu0 0
  %172 = vmatpush1.bf16.msra.mxu0 0
  %173 = vmatprep.subr.bf16.mxu0 0
  %174 = vmatpush1.bf16.msra.mxu0 0
  %175 = vmatprep.subr.bf16.mxu0 0
  %176 = vmatpush1.bf16.msra.mxu0 0
  %177 = vmatprep.subr.bf16.mxu0 0
  %178 = vmatpush1.bf16.msra.mxu0 0
  %179 = vmatprep.subr.bf16.mxu0 0
  %180 = vmatpush1.bf16.msra.mxu0 0
  %181 = vmatprep.subr.bf16.mxu0 0
  %182 = vmatpush1.bf16.msra.mxu0 0
  %183 = vmatprep.subr.bf16.mxu0 0
  %184 = vmatpush1.bf16.msra.mxu0 0
  %185 = vmatprep.subr.bf16.mxu0 0
  %186 = vmatpush1.bf16.msra.mxu0 0
  %187 = vmatprep.mubr.bf16.mxu0 0
  %188 = vmatmul.mubr.bf16.gmra.mrb[0].mxu0 %v153
  %v189 = vpop.f32.mrb[0].mxu0
  %v190 = vadd.f32 %v138, %v189
  %v191 = vpop.f32.mrb[0].mxu0
  %v192 = vpop.f32.mrb[0].mxu0
  %v193 = vadd.f32 %v138, %v192
  %v194 = vpop.f32.mrb[0].mxu0
  %195 = vdwg.mxu0
  %v196 = vld [vmem:[%s6] sm:$0xf]
  %v197 = vld [vmem:[%s6 + $0x4] sm:$0xf]
  %v198 = vld [vmem:[%s6 + $0x8] sm:$0xf]
  %v199 = vld [vmem:[%s6 + $0xc] sm:$0xf]
  %v200 = vld [vmem:[%s7] sm:$0x1]
  %v202 = vlaneseq
  %v203 = vshrl.u32 %v202, 7
  %v204 = vsub.s32 0, %v203
  %v205 = vrot.slane %v200, %v204
  %v211 = vunpack.c.l.b16 %v196
  %v212 = vunpack.c.l.b16 %v197
  %v213 = vunpack.c.l.b16 %v198
  %v214 = vunpack.c.l.b16 %v199
  %v215 = vpack.c.b16 %v212, %v211
  %v216 = vpack.c.b16 %v214, %v213
  %219 = vmatprep.subr.bf16.mxu0 0
  %220 = vmatpush1.bf16.msra.mxu0 %v215
  %221 = vmatprep.subr.bf16.mxu0 0
  %222 = vmatpush1.bf16.msra.mxu0 %v216
  %223 = vmatprep.subr.bf16.mxu0 0
  %224 = vmatpush1.bf16.msra.mxu0 0
  %225 = vmatprep.subr.bf16.mxu0 0
  %226 = vmatpush1.bf16.msra.mxu0 0
  %227 = vmatprep.subr.bf16.mxu0 0
  %228 = vmatpush1.bf16.msra.mxu0 0
  %229 = vmatprep.subr.bf16.mxu0 0
  %230 = vmatpush1.bf16.msra.mxu0 0
  %231 = vmatprep.subr.bf16.mxu0 0
  %232 = vmatpush1.bf16.msra.mxu0 0
  %233 = vmatprep.subr.bf16.mxu0 0
  %234 = vmatpush1.bf16.msra.mxu0 0
  %235 = vmatprep.subr.bf16.mxu0 0
  %236 = vmatpush1.bf16.msra.mxu0 0
  %237 = vmatprep.subr.bf16.mxu0 0
  %238 = vmatpush1.bf16.msra.mxu0 0
  %239 = vmatprep.subr.bf16.mxu0 0
  %240 = vmatpush1.bf16.msra.mxu0 0
  %241 = vmatprep.subr.bf16.mxu0 0
  %242 = vmatpush1.bf16.msra.mxu0 0
  %243 = vmatprep.subr.bf16.mxu0 0
  %244 = vmatpush1.bf16.msra.mxu0 0
  %245 = vmatprep.subr.bf16.mxu0 0
  %246 = vmatpush1.bf16.msra.mxu0 0
  %247 = vmatprep.subr.bf16.mxu0 0
  %248 = vmatpush1.bf16.msra.mxu0 0
  %249 = vmatprep.subr.bf16.mxu0 0
  %250 = vmatpush1.bf16.msra.mxu0 0
  %251 = vmatprep.mubr.bf16.mxu0 0
  %252 = vmatmul.mubr.bf16.gmra.mrb[0].mxu0 %v153
  %v253 = vpop.f32.mrb[0].mxu0
  %v254 = vadd.f32 %v205, %v253
  %v255 = vpop.f32.mrb[0].mxu0
  %v256 = vpop.f32.mrb[0].mxu0
  %v257 = vadd.f32 %v205, %v256
  %v258 = vpop.f32.mrb[0].mxu0
  %259 = vdwg.mxu0
  %v260 = vld [vmem:[%s8] sm:$0xf]
  %v261 = vld [vmem:[%s8 + $0x4] sm:$0xf]
  %v262 = vld [vmem:[%s8 + $0x8] sm:$0xf]
  %v263 = vld [vmem:[%s8 + $0xc] sm:$0xf]
  %v264 = vld [vmem:[%s9] sm:$0x1]
  %v266 = vlaneseq
  %v267 = vshrl.u32 %v266, 7
  %v268 = vsub.s32 0, %v267
  %v269 = vrot.slane %v264, %v268
  %v275 = vunpack.c.l.b16 %v260
  %v276 = vunpack.c.l.b16 %v261
  %v277 = vunpack.c.l.b16 %v262
  %v278 = vunpack.c.l.b16 %v263
  %v279 = vpack.c.b16 %v276, %v275
  %v280 = vpack.c.b16 %v278, %v277
  %283 = vmatprep.subr.bf16.mxu0 0
  %284 = vmatpush1.bf16.msra.mxu0 %v279
  %285 = vmatprep.subr.bf16.mxu0 0
  %286 = vmatpush1.bf16.msra.mxu0 %v280
  %287 = vmatprep.subr.bf16.mxu0 0
  %288 = vmatpush1.bf16.msra.mxu0 0
  %289 = vmatprep.subr.bf16.mxu0 0
  %290 = vmatpush1.bf16.msra.mxu0 0
  %291 = vmatprep.subr.bf16.mxu0 0
  %292 = vmatpush1.bf16.msra.mxu0 0
  %293 = vmatprep.subr.bf16.mxu0 0
  %294 = vmatpush1.bf16.msra.mxu0 0
  %295 = vmatprep.subr.bf16.mxu0 0
  %296 = vmatpush1.bf16.msra.mxu0 0
  %297 = vmatprep.subr.bf16.mxu0 0
  %298 = vmatpush1.bf16.msra.mxu0 0
  %299 = vmatprep.subr.bf16.mxu0 0
  %300 = vmatpush1.bf16.msra.mxu0 0
  %301 = vmatprep.subr.bf16.mxu0 0
  %302 = vmatpush1.bf16.msra.mxu0 0
  %303 = vmatprep.subr.bf16.mxu0 0
  %304 = vmatpush1.bf16.msra.mxu0 0
  %305 = vmatprep.subr.bf16.mxu0 0
  %306 = vmatpush1.bf16.msra.mxu0 0
  %307 = vmatprep.subr.bf16.mxu0 0
  %308 = vmatpush1.bf16.msra.mxu0 0
  %309 = vmatprep.subr.bf16.mxu0 0
  %310 = vmatpush1.bf16.msra.mxu0 0
  %311 = vmatprep.subr.bf16.mxu0 0
  %312 = vmatpush1.bf16.msra.mxu0 0
  %313 = vmatprep.subr.bf16.mxu0 0
  %314 = vmatpush1.bf16.msra.mxu0 0
  %315 = vmatprep.mubr.bf16.mxu0 0
  %316 = vmatmul.mubr.bf16.gmra.mrb[0].mxu0 %v153
  %v317 = vpop.f32.mrb[0].mxu0
  %v318 = vadd.f32 %v269, %v317
  %v319 = vpop.f32.mrb[0].mxu0
  %v320 = vpop.f32.mrb[0].mxu0
  %v321 = vadd.f32 %v269, %v320
  %v322 = vpop.f32.mrb[0].mxu0
  %323 = vdwg.mxu0
  %vm324 = vcmask 130048
  %v326 = vsel %vm324, %v190, 0
  %v329 = vsel %vm324, %v193, 0
  %v332 = vsel %vm324, %v254, 0
  %v335 = vsel %vm324, %v257, 0
  %337 = vmatprep.subr.mxu0 0.0
  %338 = vmatpush1.xpose.msra.mxu0 %v332
  %339 = vmatprep.subr.mxu0 0.0
  %340 = vmatpush1.xpose.msra.mxu0 %v335
  %341 = vmatprep.subr.mxu0 0.0
  %342 = vmatpush1.xpose.msra.mxu0 0.0
  %343 = vmatprep.subr.mxu0 0.0
  %344 = vmatpush1.xpose.msra.mxu0 0.0
  %345 = vmatprep.subr.mxu0 0.0
  %346 = vmatpush1.xpose.msra.mxu0 0.0
  %347 = vmatprep.subr.mxu0 0.0
  %348 = vmatpush1.xpose.msra.mxu0 0.0
  %349 = vmatprep.subr.mxu0 0.0
  %350 = vmatpush1.xpose.msra.mxu0 0.0
  %351 = vmatprep.subr.mxu0 0.0
  %352 = vmatpush1.xpose.msra.mxu0 0.0
  %353 = vmatprep.subr.mxu0 0.0
  %354 = vmatpush1.xpose.msra.mxu0 0.0
  %355 = vmatprep.subr.mxu0 0.0
  %356 = vmatpush1.xpose.msra.mxu0 0.0
  %357 = vmatprep.subr.mxu0 0.0
  %358 = vmatpush1.xpose.msra.mxu0 0.0
  %359 = vmatprep.subr.mxu0 0.0
  %360 = vmatpush1.xpose.msra.mxu0 0.0
  %361 = vmatprep.subr.mxu0 0.0
  %362 = vmatpush1.xpose.msra.mxu0 0.0
  %363 = vmatprep.subr.mxu0 0.0
  %364 = vmatpush1.xpose.msra.mxu0 0.0
  %365 = vmatprep.subr.mxu0 0.0
  %366 = vmatpush1.xpose.msra.mxu0 0.0
  %367 = vmatprep.subr.mxu0 0.0
  %368 = vmatpush1.xpose.msra.mxu0 0.0
  %369 = vmatprep.subr.mxu0 0.0
  %370 = vmatpush1.xpose.msra.mxu0 0.0
  %371 = vmatprep.subr.mxu0 0.0
  %372 = vmatpush1.xpose.msra.mxu0 0.0
  %373 = vmatprep.subr.mxu0 0.0
  %374 = vmatpush1.xpose.msra.mxu0 0.0
  %375 = vmatprep.subr.mxu0 0.0
  %376 = vmatpush1.xpose.msra.mxu0 0.0
  %377 = vmatprep.subr.mxu0 0.0
  %378 = vmatpush1.xpose.msra.mxu0 0.0
  %379 = vmatprep.subr.mxu0 0.0
  %380 = vmatpush1.xpose.msra.mxu0 0.0
  %381 = vmatprep.subr.mxu0 0.0
  %382 = vmatpush1.xpose.msra.mxu0 0.0
  %383 = vmatprep.subr.mxu0 0.0
  %384 = vmatpush1.xpose.msra.mxu0 0.0
  %385 = vmatprep.subr.mxu0 0.0
  %386 = vmatpush1.xpose.msra.mxu0 0.0
  %387 = vmatprep.subr.mxu0 0.0
  %388 = vmatpush1.xpose.msra.mxu0 0.0
  %389 = vmatprep.subr.mxu0 0.0
  %390 = vmatpush1.xpose.msra.mxu0 0.0
  %391 = vmatprep.subr.mxu0 0.0
  %392 = vmatpush1.xpose.msra.mxu0 0.0
  %393 = vmatprep.subr.mxu0 0.0
  %394 = vmatpush1.xpose.msra.mxu0 0.0
  %395 = vmatprep.subr.mxu0 0.0
  %396 = vmatpush1.xpose.msra.mxu0 0.0
  %397 = vmatprep.subr.mxu0 0.0
  %398 = vmatpush1.xpose.msra.mxu0 0.0
  %399 = vmatprep.subr.mxu0 0.0
  %400 = vmatpush1.xpose.msra.mxu0 0.0
  %401 = vmatprep.mubr.f32.mxu0 0.0
  %402 = vmatmul.mubr.f32.gmra.mrb[0].mxu0 %v326
  %v403 = vpop.f32.mrb[0].mxu0
  %v404 = vadd.f32 0.0, %v403
  %v405 = vpop.f32.mrb[0].mxu0
  %406 = vmatprep.mubr.f32.mxu0 0.0
  %407 = vmatmul.mubr.f32.gmra.mrb[0].mxu0 %v329
  %v408 = vpop.f32.mrb[0].mxu0
  %v409 = vadd.f32 0.0, %v408
  %v410 = vpop.f32.mrb[0].mxu0
  %411 = vdwg.mxu0
  %v412 = vmul.f32 %v404, 0.25
  %v413 = vmul.f32 %v409, 0.25
  %v414 = vadd.f32 %v412, %v126
  %v415 = vadd.f32 %v413, %v127
  %v416 = vsel %vm324, %v414, -inf
  %417 = vmax.xlane.f32.xlu0 %v416
  %v418 = vpop.xlane.xlu0 %417
  %v419 = vsel %vm324, %v415, -inf
  %420 = vmax.xlane.f32.xlu0 %v419
  %v421 = vpop.xlane.xlu0 %420
  %v422 = vsub.f32 %v414, %v418
  %v423 = vsub.f32 %v415, %v421
  %v424 = vmul.f32 %v422, 1.442695
  %v425 = vpow.pop %v424
  %v426 = vmul.f32 %v423, 1.442695
  %v427 = vpow.pop %v426
  %v428 = vsel %vm324, %v425, 0.0
  %429 = vadd.xlane.f32.xlu0 %v428
  %v430 = vpop.xlane.xlu0 %429
  %v431 = vsel %vm324, %v427, 0.0
  %432 = vadd.xlane.f32.xlu0 %v431
  %v433 = vpop.xlane.xlu0 %432
  %v434 = vrcp.pop %v430
  %v435 = vrcp.pop %v433
  %v436 = vmul.f32 %v425, %v434
  %v437 = vmul.f32 %v427, %v435
  %v439 = vsel %vm324, %v436, 0
  %v442 = vsel %vm324, %v437, 0
  %444 = vmatprep.subr.mxu0 0.0
  %445 = vmatpush1.msra.mxu0 %v318
  %446 = vmatprep.subr.mxu0 0.0
  %447 = vmatpush1.msra.mxu0 %v321
  %448 = vmatprep.subr.mxu0 0.0
  %449 = vmatpush1.msra.mxu0 0.0
  %450 = vmatprep.subr.mxu0 0.0
  %451 = vmatpush1.msra.mxu0 0.0
  %452 = vmatprep.subr.mxu0 0.0
  %453 = vmatpush1.msra.mxu0 0.0
  %454 = vmatprep.subr.mxu0 0.0
  %455 = vmatpush1.msra.mxu0 0.0
  %456 = vmatprep.subr.mxu0 0.0
  %457 = vmatpush1.msra.mxu0 0.0
  %458 = vmatprep.subr.mxu0 0.0
  %459 = vmatpush1.msra.mxu0 0.0
  %460 = vmatprep.subr.mxu0 0.0
  %461 = vmatpush1.msra.mxu0 0.0
  %462 = vmatprep.subr.mxu0 0.0
  %463 = vmatpush1.msra.mxu0 0.0
  %464 = vmatprep.subr.mxu0 0.0
  %465 = vmatpush1.msra.mxu0 0.0
  %466 = vmatprep.subr.mxu0 0.0
  %467 = vmatpush1.msra.mxu0 0.0
  %468 = vmatprep.subr.mxu0 0.0
  %469 = vmatpush1.msra.mxu0 0.0
  %470 = vmatprep.subr.mxu0 0.0
  %471 = vmatpush1.msra.mxu0 0.0
  %472 = vmatprep.subr.mxu0 0.0
  %473 = vmatpush1.msra.mxu0 0.0
  %474 = vmatprep.subr.mxu0 0.0
  %475 = vmatpush1.msra.mxu0 0.0
  %476 = vmatprep.subr.mxu0 0.0
  %477 = vmatpush1.msra.mxu0 0.0
  %478 = vmatprep.subr.mxu0 0.0
  %479 = vmatpush1.msra.mxu0 0.0
  %480 = vmatprep.subr.mxu0 0.0
  %481 = vmatpush1.msra.mxu0 0.0
  %482 = vmatprep.subr.mxu0 0.0
  %483 = vmatpush1.msra.mxu0 0.0
  %484 = vmatprep.subr.mxu0 0.0
  %485 = vmatpush1.msra.mxu0 0.0
  %486 = vmatprep.subr.mxu0 0.0
  %487 = vmatpush1.msra.mxu0 0.0
  %488 = vmatprep.subr.mxu0 0.0
  %489 = vmatpush1.msra.mxu0 0.0
  %490 = vmatprep.subr.mxu0 0.0
  %491 = vmatpush1.msra.mxu0 0.0
  %492 = vmatprep.subr.mxu0 0.0
  %493 = vmatpush1.msra.mxu0 0.0
  %494 = vmatprep.subr.mxu0 0.0
  %495 = vmatpush1.msra.mxu0 0.0
  %496 = vmatprep.subr.mxu0 0.0
  %497 = vmatpush1.msra.mxu0 0.0
  %498 = vmatprep.subr.mxu0 0.0
  %499 = vmatpush1.msra.mxu0 0.0
  %500 = vmatprep.subr.mxu0 0.0
  %501 = vmatpush1.msra.mxu0 0.0
  %502 = vmatprep.subr.mxu0 0.0
  %503 = vmatpush1.msra.mxu0 0.0
  %504 = vmatprep.subr.mxu0 0.0
  %505 = vmatpush1.msra.mxu0 0.0
  %506 = vmatprep.subr.mxu0 0.0
  %507 = vmatpush1.msra.mxu0 0.0
  %508 = vmatprep.mubr.f32.mxu0 0.0
  %509 = vmatmul.mubr.f32.gmra.mrb[0].mxu0 %v439
  %v510 = vpop.f32.mrb[0].mxu0
  %v511 = vadd.f32 0.0, %v510
  %v512 = vpop.f32.mrb[0].mxu0
  %513 = vmatprep.mubr.f32.mxu0 0.0
  %514 = vmatmul.mubr.f32.gmra.mrb[0].mxu0 %v442
  %v515 = vpop.f32.mrb[0].mxu0
  %v516 = vadd.f32 0.0, %v515
  %v517 = vpop.f32.mrb[0].mxu0
  %518 = vdwg.mxu0
  %519 = vrot.lane.b32.xlu0 %v190, 112
  %v520 = vpop.permute.xlu0 %519
  %521 = vrot.lane.b32.xlu0 %v193, 112
  %v522 = vpop.permute.xlu0 %521
  %523 = vrot.lane.b32.xlu0 %v254, 112
  %v524 = vpop.permute.xlu0 %523
  %525 = vrot.lane.b32.xlu0 %v257, 112
  %v526 = vpop.permute.xlu0 %525
  %v527 = vsel %vm324, %v520, 0
  %v529 = vsel %vm324, %v522, 0
  %v531 = vsel %vm324, %v524, 0
  %v533 = vsel %vm324, %v526, 0
  %535 = vmatprep.subr.mxu0 0.0
  %536 = vmatpush1.xpose.msra.mxu0 %v531
  %537 = vmatprep.subr.mxu0 0.0
  %538 = vmatpush1.xpose.msra.mxu0 %v533
  %539 = vmatprep.subr.mxu0 0.0
  %540 = vmatpush1.xpose.msra.mxu0 0.0
  %541 = vmatprep.subr.mxu0 0.0
  %542 = vmatpush1.xpose.msra.mxu0 0.0
  %543 = vmatprep.subr.mxu0 0.0
  %544 = vmatpush1.xpose.msra.mxu0 0.0
  %545 = vmatprep.subr.mxu0 0.0
  %546 = vmatpush1.xpose.msra.mxu0 0.0
  %547 = vmatprep.subr.mxu0 0.0
  %548 = vmatpush1.xpose.msra.mxu0 0.0
  %549 = vmatprep.subr.mxu0 0.0
  %550 = vmatpush1.xpose.msra.mxu0 0.0
  %551 = vmatprep.subr.mxu0 0.0
  %552 = vmatpush1.xpose.msra.mxu0 0.0
  %553 = vmatprep.subr.mxu0 0.0
  %554 = vmatpush1.xpose.msra.mxu0 0.0
  %555 = vmatprep.subr.mxu0 0.0
  %556 = vmatpush1.xpose.msra.mxu0 0.0
  %557 = vmatprep.subr.mxu0 0.0
  %558 = vmatpush1.xpose.msra.mxu0 0.0
  %559 = vmatprep.subr.mxu0 0.0
  %560 = vmatpush1.xpose.msra.mxu0 0.0
  %561 = vmatprep.subr.mxu0 0.0
  %562 = vmatpush1.xpose.msra.mxu0 0.0
  %563 = vmatprep.subr.mxu0 0.0
  %564 = vmatpush1.xpose.msra.mxu0 0.0
  %565 = vmatprep.subr.mxu0 0.0
  %566 = vmatpush1.xpose.msra.mxu0 0.0
  %567 = vmatprep.subr.mxu0 0.0
  %568 = vmatpush1.xpose.msra.mxu0 0.0
  %569 = vmatprep.subr.mxu0 0.0
  %570 = vmatpush1.xpose.msra.mxu0 0.0
  %571 = vmatprep.subr.mxu0 0.0
  %572 = vmatpush1.xpose.msra.mxu0 0.0
  %573 = vmatprep.subr.mxu0 0.0
  %574 = vmatpush1.xpose.msra.mxu0 0.0
  %575 = vmatprep.subr.mxu0 0.0
  %576 = vmatpush1.xpose.msra.mxu0 0.0
  %577 = vmatprep.subr.mxu0 0.0
  %578 = vmatpush1.xpose.msra.mxu0 0.0
  %579 = vmatprep.subr.mxu0 0.0
  %580 = vmatpush1.xpose.msra.mxu0 0.0
  %581 = vmatprep.subr.mxu0 0.0
  %582 = vmatpush1.xpose.msra.mxu0 0.0
  %583 = vmatprep.subr.mxu0 0.0
  %584 = vmatpush1.xpose.msra.mxu0 0.0
  %585 = vmatprep.subr.mxu0 0.0
  %586 = vmatpush1.xpose.msra.mxu0 0.0
  %587 = vmatprep.subr.mxu0 0.0
  %588 = vmatpush1.xpose.msra.mxu0 0.0
  %589 = vmatprep.subr.mxu0 0.0
  %590 = vmatpush1.xpose.msra.mxu0 0.0
  %591 = vmatprep.subr.mxu0 0.0
  %592 = vmatpush1.xpose.msra.mxu0 0.0
  %593 = vmatprep.subr.mxu0 0.0
  %594 = vmatpush1.xpose.msra.mxu0 0.0
  %595 = vmatprep.subr.mxu0 0.0
  %596 = vmatpush1.xpose.msra.mxu0 0.0
  %597 = vmatprep.subr.mxu0 0.0
  %598 = vmatpush1.xpose.msra.mxu0 0.0
  %599 = vmatprep.mubr.f32.mxu0 0.0
  %600 = vmatmul.mubr.f32.gmra.mrb[0].mxu0 %v527
  %v601 = vpop.f32.mrb[0].mxu0
  %v602 = vadd.f32 0.0, %v601
  %v603 = vpop.f32.mrb[0].mxu0
  %604 = vmatprep.mubr.f32.mxu0 0.0
  %605 = vmatmul.mubr.f32.gmra.mrb[0].mxu0 %v529
  %v606 = vpop.f32.mrb[0].mxu0
  %v607 = vadd.f32 0.0, %v606
  %v608 = vpop.f32.mrb[0].mxu0
  %609 = vdwg.mxu0
  %v610 = vmul.f32 %v602, 0.25
  %v611 = vmul.f32 %v607, 0.25
  %v612 = vadd.f32 %v610, %v126
  %v613 = vadd.f32 %v611, %v127
  %v614 = vsel %vm324, %v612, -inf
  %615 = vmax.xlane.f32.xlu0 %v614
  %v616 = vpop.xlane.xlu0 %615
  %v617 = vsel %vm324, %v613, -inf
  %618 = vmax.xlane.f32.xlu0 %v617
  %v619 = vpop.xlane.xlu0 %618
  %v620 = vsub.f32 %v612, %v616
  %v621 = vsub.f32 %v613, %v619
  %v622 = vmul.f32 %v620, 1.442695
  %v623 = vpow.pop %v622
  %v624 = vmul.f32 %v621, 1.442695
  %v625 = vpow.pop %v624
  %v626 = vsel %vm324, %v623, 0.0
  %627 = vadd.xlane.f32.xlu0 %v626
  %v628 = vpop.xlane.xlu0 %627
  %v629 = vsel %vm324, %v625, 0.0
  %630 = vadd.xlane.f32.xlu0 %v629
  %v631 = vpop.xlane.xlu0 %630
  %v632 = vrcp.pop %v628
  %v633 = vrcp.pop %v631
  %v634 = vmul.f32 %v623, %v632
  %v635 = vmul.f32 %v625, %v633
  %638 = vrot.lane.b32.xlu0 %v318, 112
  %v639 = vpop.permute.xlu0 %638
  %640 = vrot.lane.b32.xlu0 %v321, 112
  %v641 = vpop.permute.xlu0 %640
  %v645 = vsel %vm324, %v634, 0
  %v648 = vsel %vm324, %v635, 0
  %650 = vmatprep.subr.mxu0 0.0
  %651 = vmatpush1.msra.mxu0 %v639
  %652 = vmatprep.subr.mxu0 0.0
  %653 = vmatpush1.msra.mxu0 %v641
  %654 = vmatprep.subr.mxu0 0.0
  %655 = vmatpush1.msra.mxu0 0.0
  %656 = vmatprep.subr.mxu0 0.0
  %657 = vmatpush1.msra.mxu0 0.0
  %658 = vmatprep.subr.mxu0 0.0
  %659 = vmatpush1.msra.mxu0 0.0
  %660 = vmatprep.subr.mxu0 0.0
  %661 = vmatpush1.msra.mxu0 0.0
  %662 = vmatprep.subr.mxu0 0.0
  %663 = vmatpush1.msra.mxu0 0.0
  %664 = vmatprep.subr.mxu0 0.0
  %665 = vmatpush1.msra.mxu0 0.0
  %666 = vmatprep.subr.mxu0 0.0
  %667 = vmatpush1.msra.mxu0 0.0
  %668 = vmatprep.subr.mxu0 0.0
  %669 = vmatpush1.msra.mxu0 0.0
  %670 = vmatprep.subr.mxu0 0.0
  %671 = vmatpush1.msra.mxu0 0.0
  %672 = vmatprep.subr.mxu0 0.0
  %673 = vmatpush1.msra.mxu0 0.0
  %674 = vmatprep.subr.mxu0 0.0
  %675 = vmatpush1.msra.mxu0 0.0
  %676 = vmatprep.subr.mxu0 0.0
  %677 = vmatpush1.msra.mxu0 0.0
  %678 = vmatprep.subr.mxu0 0.0
  %679 = vmatpush1.msra.mxu0 0.0
  %680 = vmatprep.subr.mxu0 0.0
  %681 = vmatpush1.msra.mxu0 0.0
  %682 = vmatprep.subr.mxu0 0.0
  %683 = vmatpush1.msra.mxu0 0.0
  %684 = vmatprep.subr.mxu0 0.0
  %685 = vmatpush1.msra.mxu0 0.0
  %686 = vmatprep.subr.mxu0 0.0
  %687 = vmatpush1.msra.mxu0 0.0
  %688 = vmatprep.subr.mxu0 0.0
  %689 = vmatpush1.msra.mxu0 0.0
  %690 = vmatprep.subr.mxu0 0.0
  %691 = vmatpush1.msra.mxu0 0.0
  %692 = vmatprep.subr.mxu0 0.0
  %693 = vmatpush1.msra.mxu0 0.0
  %694 = vmatprep.subr.mxu0 0.0
  %695 = vmatpush1.msra.mxu0 0.0
  %696 = vmatprep.subr.mxu0 0.0
  %697 = vmatpush1.msra.mxu0 0.0
  %698 = vmatprep.subr.mxu0 0.0
  %699 = vmatpush1.msra.mxu0 0.0
  %700 = vmatprep.subr.mxu0 0.0
  %701 = vmatpush1.msra.mxu0 0.0
  %702 = vmatprep.subr.mxu0 0.0
  %703 = vmatpush1.msra.mxu0 0.0
  %704 = vmatprep.subr.mxu0 0.0
  %705 = vmatpush1.msra.mxu0 0.0
  %706 = vmatprep.subr.mxu0 0.0
  %707 = vmatpush1.msra.mxu0 0.0
  %708 = vmatprep.subr.mxu0 0.0
  %709 = vmatpush1.msra.mxu0 0.0
  %710 = vmatprep.subr.mxu0 0.0
  %711 = vmatpush1.msra.mxu0 0.0
  %712 = vmatprep.subr.mxu0 0.0
  %713 = vmatpush1.msra.mxu0 0.0
  %714 = vmatprep.mubr.f32.mxu0 0.0
  %715 = vmatmul.mubr.f32.gmra.mrb[0].mxu0 %v645
  %v716 = vpop.f32.mrb[0].mxu0
  %v717 = vadd.f32 0.0, %v716
  %v718 = vpop.f32.mrb[0].mxu0
  %719 = vmatprep.mubr.f32.mxu0 0.0
  %720 = vmatmul.mubr.f32.gmra.mrb[0].mxu0 %v648
  %v721 = vpop.f32.mrb[0].mxu0
  %v722 = vadd.f32 0.0, %v721
  %v723 = vpop.f32.mrb[0].mxu0
  %724 = vdwg.mxu0
  %727 = vrot.lane.b32.xlu0 %v717, 16
  %v728 = vpop.permute.xlu0 %727
  %729 = vrot.lane.b32.xlu0 %v722, 16
  %v730 = vpop.permute.xlu0 %729
  %v733 = vsel %vm324, %v511, %v728
  %v734 = vsel %vm324, %v516, %v730
  %v735 = vpack.c.bf16 %v734, %v733
  %v736 = vld [vmem:[%s10] sm:$0xf]
  %v737 = vld [vmem:[%s10 + $0x4] sm:$0xf]
  %v738 = vld [vmem:[%s10 + $0x8] sm:$0xf]
  %v739 = vld [vmem:[%s10 + $0xc] sm:$0xf]
  %v740 = vld [vmem:[%s11] sm:$0x1]
  %v742 = vlaneseq
  %v743 = vshrl.u32 %v742, 7
  %v744 = vsub.s32 0, %v743
  %v745 = vrot.slane %v740, %v744
  %v751 = vunpack.c.l.b16 %v736
  %v752 = vunpack.c.l.b16 %v737
  %v753 = vunpack.c.l.b16 %v738
  %v754 = vunpack.c.l.b16 %v739
  %v755 = vpack.c.b16 %v752, %v751
  %v756 = vpack.c.b16 %v754, %v753
  %v760 = vsel %vm82, %v735, 0
  %762 = vmatprep.subr.bf16.mxu0 0
  %763 = vmatpush1.bf16.msra.mxu0 %v755
  %764 = vmatprep.subr.bf16.mxu0 0
  %765 = vmatpush1.bf16.msra.mxu0 %v756
  %766 = vmatprep.subr.bf16.mxu0 0
  %767 = vmatpush1.bf16.msra.mxu0 0
  %768 = vmatprep.subr.bf16.mxu0 0
  %769 = vmatpush1.bf16.msra.mxu0 0
  %770 = vmatprep.subr.bf16.mxu0 0
  %771 = vmatpush1.bf16.msra.mxu0 0
  %772 = vmatprep.subr.bf16.mxu0 0
  %773 = vmatpush1.bf16.msra.mxu0 0
  %774 = vmatprep.subr.bf16.mxu0 0
  %775 = vmatpush1.bf16.msra.mxu0 0
  %776 = vmatprep.subr.bf16.mxu0 0
  %777 = vmatpush1.bf16.msra.mxu0 0
  %778 = vmatprep.subr.bf16.mxu0 0
  %779 = vmatpush1.bf16.msra.mxu0 0
  %780 = vmatprep.subr.bf16.mxu0 0
  %781 = vmatpush1.bf16.msra.mxu0 0
  %782 = vmatprep.subr.bf16.mxu0 0
  %783 = vmatpush1.bf16.msra.mxu0 0
  %784 = vmatprep.subr.bf16.mxu0 0
  %785 = vmatpush1.bf16.msra.mxu0 0
  %786 = vmatprep.subr.bf16.mxu0 0
  %787 = vmatpush1.bf16.msra.mxu0 0
  %788 = vmatprep.subr.bf16.mxu0 0
  %789 = vmatpush1.bf16.msra.mxu0 0
  %790 = vmatprep.subr.bf16.mxu0 0
  %791 = vmatpush1.bf16.msra.mxu0 0
  %792 = vmatprep.subr.bf16.mxu0 0
  %793 = vmatpush1.bf16.msra.mxu0 0
  %794 = vmatprep.mubr.bf16.mxu0 0
  %795 = vmatmul.mubr.bf16.gmra.mrb[0].mxu0 %v760
  %v796 = vpop.f32.mrb[0].mxu0
  %v797 = vadd.f32 %v745, %v796
  %v798 = vpop.f32.mrb[0].mxu0
  %v799 = vpop.f32.mrb[0].mxu0
  %v800 = vadd.f32 %v745, %v799
  %v801 = vpop.f32.mrb[0].mxu0
  %802 = vdwg.mxu0
  %v803 = vadd.f32 %v124, %v797
  %v804 = vadd.f32 %v125, %v800
  %v805 = vld [vmem:[%s12] sm:$0x1]
  %v806 = vld [vmem:[%s13] sm:$0x1]
  %v807 = vsel %vm82, %v803, 0.0
  %808 = vadd.xlane.f32.xlu0 %v807
  %v809 = vpop.xlane.xlu0 %808
  %v810 = vsel %vm82, %v804, 0.0
  %811 = vadd.xlane.f32.xlu0 %v810
  %v812 = vpop.xlane.xlu0 %811
  %v813 = vmul.f32 %v809, %v89
  %v814 = vmul.f32 %v812, %v89
  %v815 = vsub.f32 %v803, %v813
  %v816 = vsub.f32 %v804, %v814
  %v817 = vmul.f32 %v815, %v815
  %v818 = vmul.f32 %v816, %v816
  %v819 = vsel %vm82, %v817, 0.0
  %820 = vadd.xlane.f32.xlu0 %v819
  %v821 = vpop.xlane.xlu0 %820
  %v822 = vsel %vm82, %v818, 0.0
  %823 = vadd.xlane.f32.xlu0 %v822
  %v824 = vpop.xlane.xlu0 %823
  %v825 = vmul.f32 %v821, %v89
  %v826 = vmul.f32 %v824, %v89
  %v827 = vadd.f32 %v825, 1e-12
  %v828 = vadd.f32 %v826, 1e-12
  %v829 = vrsqrt.pop %v827
  %v830 = vrsqrt.pop %v828
  %v831 = vmul.f32 %v815, %v829
  %v832 = vmul.f32 %v816, %v830
  %v834 = vlaneseq
  %v835 = vshrl.u32 %v834, 7
  %v836 = vsub.s32 0, %v835
  %v837 = vrot.slane %v805, %v836
  %v839 = vmul.f32 %v831, %v837
  %v840 = vmul.f32 %v832, %v837
  %v842 = vlaneseq
  %v843 = vshrl.u32 %v842, 7
  %v844 = vsub.s32 0, %v843
  %v845 = vrot.slane %v806, %v844
  %v847 = vadd.f32 %v839, %v845
  %v848 = vadd.f32 %v840, %v845
  %v849 = vpack.c.bf16 %v848, %v847
  %v850 = vld [vmem:[%s14] sm:$0xf]
  %v851 = vld [vmem:[%s14 + $0x4] sm:$0xf]
  %v852 = vld [vmem:[%s14 + $0x8] sm:$0xf]
  %v853 = vld [vmem:[%s14 + $0xc] sm:$0xf]
  %v854 = vld [vmem:[%s15] sm:$0x1]
  %v856 = vlaneseq
  %v857 = vshrl.u32 %v856, 7
  %v858 = vsub.s32 0, %v857
  %v859 = vrot.slane %v854, %v858
  %v865 = vunpack.c.l.b16 %v850
  %v866 = vunpack.c.l.b16 %v851
  %v867 = vunpack.c.l.b16 %v852
  %v868 = vunpack.c.l.b16 %v853
  %v869 = vpack.c.b16 %v866, %v865
  %v870 = vpack.c.b16 %v868, %v867
  %v874 = vsel %vm82, %v849, 0
  %876 = vmatprep.subr.bf16.mxu0 0
  %877 = vmatpush1.bf16.msra.mxu0 %v869
  %878 = vmatprep.subr.bf16.mxu0 0
  %879 = vmatpush1.bf16.msra.mxu0 %v870
  %880 = vmatprep.subr.bf16.mxu0 0
  %881 = vmatpush1.bf16.msra.mxu0 0
  %882 = vmatprep.subr.bf16.mxu0 0
  %883 = vmatpush1.bf16.msra.mxu0 0
  %884 = vmatprep.subr.bf16.mxu0 0
  %885 = vmatpush1.bf16.msra.mxu0 0
  %886 = vmatprep.subr.bf16.mxu0 0
  %887 = vmatpush1.bf16.msra.mxu0 0
  %888 = vmatprep.subr.bf16.mxu0 0
  %889 = vmatpush1.bf16.msra.mxu0 0
  %890 = vmatprep.subr.bf16.mxu0 0
  %891 = vmatpush1.bf16.msra.mxu0 0
  %892 = vmatprep.subr.bf16.mxu0 0
  %893 = vmatpush1.bf16.msra.mxu0 0
  %894 = vmatprep.subr.bf16.mxu0 0
  %895 = vmatpush1.bf16.msra.mxu0 0
  %896 = vmatprep.subr.bf16.mxu0 0
  %897 = vmatpush1.bf16.msra.mxu0 0
  %898 = vmatprep.subr.bf16.mxu0 0
  %899 = vmatpush1.bf16.msra.mxu0 0
  %900 = vmatprep.subr.bf16.mxu0 0
  %901 = vmatpush1.bf16.msra.mxu0 0
  %902 = vmatprep.subr.bf16.mxu0 0
  %903 = vmatpush1.bf16.msra.mxu0 0
  %904 = vmatprep.subr.bf16.mxu0 0
  %905 = vmatpush1.bf16.msra.mxu0 0
  %906 = vmatprep.subr.bf16.mxu0 0
  %907 = vmatpush1.bf16.msra.mxu0 0
  %908 = vmatprep.mubr.bf16.mxu0 0
  %909 = vmatmul.mubr.bf16.gmra.mrb[0].mxu0 %v874
  %v910 = vpop.f32.mrb[0].mxu0
  %v911 = vadd.f32 %v859, %v910
  %v912 = vpop.f32.mrb[0].mxu0
  %v913 = vpop.f32.mrb[0].mxu0
  %v914 = vadd.f32 %v859, %v913
  %v915 = vpop.f32.mrb[0].mxu0
  %916 = vdwg.mxu0
  %v917 = vmul.f32 %v911, 0.5
  %v918 = vmul.f32 %v914, 0.5
  %v919 = vmul.f32 %v911, 0.044715
  %v920 = vmul.f32 %v914, 0.044715
  %v921 = vmul.f32 %v919, %v911
  %v922 = vmul.f32 %v920, %v914
  %v923 = vmul.f32 %v921, %v911
  %v924 = vmul.f32 %v922, %v914
  %v925 = vadd.f32 %v911, %v923
  %v926 = vadd.f32 %v914, %v924
  %v927 = vmul.f32 %v925, 0.7978846
  %v928 = vmul.f32 %v926, 0.7978846
  %v929 = vtanh.pop %v927
  %v930 = vtanh.pop %v928
  %v931 = vadd.f32 %v929, 1.0
  %v932 = vadd.f32 %v930, 1.0
  %v933 = vmul.f32 %v917, %v931
  %v934 = vmul.f32 %v918, %v932
  %v935 = vpack.c.bf16 %v934, %v933
  %v936 = vld [vmem:[%s16] sm:$0xf]
  %v937 = vld [vmem:[%s16 + $0x4] sm:$0xf]
  %v938 = vld [vmem:[%s16 + $0x8] sm:$0xf]
  %v939 = vld [vmem:[%s16 + $0xc] sm:$0xf]
  %v940 = vld [vmem:[%s16 + $0x10] sm:$0xf]
  %v941 = vld [vmem:[%s16 + $0x14] sm:$0xf]
  %v942 = vld [vmem:[%s16 + $0x18] sm:$0xf]
  %v943 = vld [vmem:[%s16 + $0x1c] sm:$0xf]
  %v944 = vld [vmem:[%s17] sm:$0x1]
  %v946 = vlaneseq
  %v947 = vshrl.u32 %v946, 7
  %v948 = vsub.s32 0, %v947
  %v949 = vrot.slane %v944, %v948
  %v959 = vunpack.c.l.b16 %v936
  %v960 = vunpack.c.l.b16 %v937
  %v961 = vunpack.c.l.b16 %v938
  %v962 = vunpack.c.l.b16 %v939
  %v963 = vunpack.c.l.b16 %v940
  %v964 = vunpack.c.l.b16 %v941
  %v965 = vunpack.c.l.b16 %v942
  %v966 = vunpack.c.l.b16 %v943
  %v967 = vpack.c.b16 %v960, %v959
  %v968 = vpack.c.b16 %v962, %v961
  %v969 = vpack.c.b16 %v964, %v963
  %v970 = vpack.c.b16 %v966, %v965
  %vm975 = vcmask 523264
  %v977 = vsel %vm975, %v935, 0
  %979 = vmatprep.subr.bf16.mxu0 0
  %980 = vmatpush1.bf16.msra.mxu0 %v967
  %981 = vmatprep.subr.bf16.mxu0 0
  %982 = vmatpush1.bf16.msra.mxu0 %v968
  %983 = vmatprep.subr.bf16.mxu0 0
  %984 = vmatpush1.bf16.msra.mxu0 %v969
  %985 = vmatprep.subr.bf16.mxu0 0
  %986 = vmatpush1.bf16.msra.mxu0 %v970
  %987 = vmatprep.subr.bf16.mxu0 0
  %988 = vmatpush1.bf16.msra.mxu0 0
  %989 = vmatprep.subr.bf16.mxu0 0
  %990 = vmatpush1.bf16.msra.mxu0 0
  %991 = vmatprep.subr.bf16.mxu0 0
  %992 = vmatpush1.bf16.msra.mxu0 0
  %993 = vmatprep.subr.bf16.mxu0 0
  %994 = vmatpush1.bf16.msra.mxu0 0
  %995 = vmatprep.subr.bf16.mxu0 0
  %996 = vmatpush1.bf16.msra.mxu0 0
  %997 = vmatprep.subr.bf16.mxu0 0
  %998 = vmatpush1.bf16.msra.mxu0 0
  %999 = vmatprep.subr.bf16.mxu0 0
  %1000 = vmatpush1.bf16.msra.mxu0 0
  %1001 = vmatprep.subr.bf16.mxu0 0
  %1002 = vmatpush1.bf16.msra.mxu0 0
  %1003 = vmatprep.subr.bf16.mxu0 0
  %1004 = vmatpush1.bf16.msra.mxu0 0
  %1005 = vmatprep.subr.bf16.mxu0 0
  %1006 = vmatpush1.bf16.msra.mxu0 0
  %1007 = vmatprep.subr.bf16.mxu0 0
  %1008 = vmatpush1.bf16.msra.mxu0 0
  %1009 = vmatprep.subr.bf16.mxu0 0
  %1010 = vmatpush1.bf16.msra.mxu0 0
  %1011 = vmatprep.mubr.bf16.mxu0 0
  %1012 = vmatmul.mubr.bf16.gmra.mrb[0].mxu0 %v977
  %v1013 = vpop.f32.mrb[0].mxu0
  %v1014 = vadd.f32 %v949, %v1013
  %v1015 = vpop.f32.mrb[0].mxu0
  %v1016 = vpop.f32.mrb[0].mxu0
  %v1017 = vadd.f32 %v949, %v1016
  %v1018 = vpop.f32.mrb[0].mxu0
  %1019 = vdwg.mxu0
  %v1020 = vadd.f32 %v847, %v1014
  %v1021 = vadd.f32 %v848, %v1017
  %v1022 = vld [vmem:[%s18] sm:$0x1]
  %v1023 = vld [vmem:[%s19] sm:$0x1]
  %v1024 = vsel %vm82, %v1020, 0.0
  %1025 = vadd.xlane.f32.xlu0 %v1024
  %v1026 = vpop.xlane.xlu0 %1025
  %v1027 = vsel %vm82, %v1021, 0.0
  %1028 = vadd.xlane.f32.xlu0 %v1027
  %v1029 = vpop.xlane.xlu0 %1028
  %v1030 = vmul.f32 %v1026, %v89
  %v1031 = vmul.f32 %v1029, %v89
  %v1032 = vsub.f32 %v1020, %v1030
  %v1033 = vsub.f32 %v1021, %v1031
  %v1034 = vmul.f32 %v1032, %v1032
  %v1035 = vmul.f32 %v1033, %v1033
  %v1036 = vsel %vm82, %v1034, 0.0
  %1037 = vadd.xlane.f32.xlu0 %v1036
  %v1038 = vpop.xlane.xlu0 %1037
  %v1039 = vsel %vm82, %v1035, 0.0
  %1040 = vadd.xlane.f32.xlu0 %v1039
  %v1041 = vpop.xlane.xlu0 %1040
  %v1042 = vmul.f32 %v1038, %v89
  %v1043 = vmul.f32 %v1041, %v89
  %v1044 = vadd.f32 %v1042, 1e-12
  %v1045 = vadd.f32 %v1043, 1e-12
  %v1046 = vrsqrt.pop %v1044
  %v1047 = vrsqrt.pop %v1045
  %v1048 = vmul.f32 %v1032, %v1046
  %v1049 = vmul.f32 %v1033, %v1047
  %v1051 = vlaneseq
  %v1052 = vshrl.u32 %v1051, 7
  %v1053 = vsub.s32 0, %v1052
  %v1054 = vrot.slane %v1022, %v1053
  %v1056 = vmul.f32 %v1048, %v1054
  %v1057 = vmul.f32 %v1049, %v1054
  %v1059 = vlaneseq
  %v1060 = vshrl.u32 %v1059, 7
  %v1061 = vsub.s32 0, %v1060
  %v1062 = vrot.slane %v1023, %v1061
  %v1064 = vadd.f32 %v1056, %v1062
  %v1065 = vadd.f32 %v1057, %v1062
  %v1066 = vpack.c.bf16 %v1065, %v1064
  %s1067 = scalar_lea.vmem %s4, 16
  %v1068 = vld [vmem:[%s1067] sm:$0xf]
  %v1069 = vld [vmem:[%s1067 + $0x4] sm:$0xf]
  %v1070 = vld [vmem:[%s1067 + $0x8] sm:$0xf]
  %v1071 = vld [vmem:[%s1067 + $0xc] sm:$0xf]
  %s1072 = scalar_lea.vmem %s5, 1
  %v1073 = vld [vmem:[%s1072] sm:$0x1]
  %v1075 = vlaneseq
  %v1076 = vshrl.u32 %v1075, 7
  %v1077 = vsub.s32 0, %v1076
  %v1078 = vrot.slane %v1073, %v1077
  %v1084 = vunpack.c.l.b16 %v1068
  %v1085 = vunpack.c.l.b16 %v1069
  %v1086 = vunpack.c.l.b16 %v1070
  %v1087 = vunpack.c.l.b16 %v1071
  %v1088 = vpack.c.b16 %v1085, %v1084
  %v1089 = vpack.c.b16 %v1087, %v1086
  %v1093 = vsel %vm82, %v1066, 0
  %1095 = vmatprep.subr.bf16.mxu0 0
  %1096 = vmatpush1.bf16.msra.mxu0 %v1088
  %1097 = vmatprep.subr.bf16.mxu0 0
  %1098 = vmatpush1.bf16.msra.mxu0 %v1089
  %1099 = vmatprep.subr.bf16.mxu0 0
  %1100 = vmatpush1.bf16.msra.mxu0 0
  %1101 = vmatprep.subr.bf16.mxu0 0
  %1102 = vmatpush1.bf16.msra.mxu0 0
  %1103 = vmatprep.subr.bf16.mxu0 0
  %1104 = vmatpush1.bf16.msra.mxu0 0
  %1105 = vmatprep.subr.bf16.mxu0 0
  %1106 = vmatpush1.bf16.msra.mxu0 0
  %1107 = vmatprep.subr.bf16.mxu0 0
  %1108 = vmatpush1.bf16.msra.mxu0 0
  %1109 = vmatprep.subr.bf16.mxu0 0
  %1110 = vmatpush1.bf16.msra.mxu0 0
  %1111 = vmatprep.subr.bf16.mxu0 0
  %1112 = vmatpush1.bf16.msra.mxu0 0
  %1113 = vmatprep.subr.bf16.mxu0 0
  %1114 = vmatpush1.bf16.msra.mxu0 0
  %1115 = vmatprep.subr.bf16.mxu0 0
  %1116 = vmatpush1.bf16.msra.mxu0 0
  %1117 = vmatprep.subr.bf16.mxu0 0
  %1118 = vmatpush1.bf16.msra.mxu0 0
  %1119 = vmatprep.subr.bf16.mxu0 0
  %1120 = vmatpush1.bf16.msra.mxu0 0
  %1121 = vmatprep.subr.bf16.mxu0 0
  %1122 = vmatpush1.bf16.msra.mxu0 0
  %1123 = vmatprep.subr.bf16.mxu0 0
  %1124 = vmatpush1.bf16.msra.mxu0 0
  %1125 = vmatprep.subr.bf16.mxu0 0
  %1126 = vmatpush1.bf16.msra.mxu0 0
  %1127 = vmatprep.mubr.bf16.mxu0 0
  %1128 = vmatmul.mubr.bf16.gmra.mrb[0].mxu0 %v1093
  %v1129 = vpop.f32.mrb[0].mxu0
  %v1130 = vadd.f32 %v1078, %v1129
  %v1131 = vpop.f32.mrb[0].mxu0
  %v1132 = vpop.f32.mrb[0].mxu0
  %v1133 = vadd.f32 %v1078, %v1132
  %v1134 = vpop.f32.mrb[0].mxu0
  %1135 = vdwg.mxu0
  %s1136 = scalar_lea.vmem %s6, 16
  %v1137 = vld [vmem:[%s1136] sm:$0xf]
  %v1138 = vld [vmem:[%s1136 + $0x4] sm:$0xf]
  %v1139 = vld [vmem:[%s1136 + $0x8] sm:$0xf]
  %v1140 = vld [vmem:[%s1136 + $0xc] sm:$0xf]
  %s1141 = scalar_lea.vmem %s7, 1
  %v1142 = vld [vmem:[%s1141] sm:$0x1]
  %v1144 = vlaneseq
  %v1145 = vshrl.u32 %v1144, 7
  %v1146 = vsub.s32 0, %v1145
  %v1147 = vrot.slane %v1142, %v1146
  %v1153 = vunpack.c.l.b16 %v1137
  %v1154 = vunpack.c.l.b16 %v1138
  %v1155 = vunpack.c.l.b16 %v1139
  %v1156 = vunpack.c.l.b16 %v1140
  %v1157 = vpack.c.b16 %v1154, %v1153
  %v1158 = vpack.c.b16 %v1156, %v1155
  %1161 = vmatprep.subr.bf16.mxu0 0
  %1162 = vmatpush1.bf16.msra.mxu0 %v1157
  %1163 = vmatprep.subr.bf16.mxu0 0
  %1164 = vmatpush1.bf16.msra.mxu0 %v1158
  %1165 = vmatprep.subr.bf16.mxu0 0
  %1166 = vmatpush1.bf16.msra.mxu0 0
  %1167 = vmatprep.subr.bf16.mxu0 0
  %1168 = vmatpush1.bf16.msra.mxu0 0
  %1169 = vmatprep.subr.bf16.mxu0 0
  %1170 = vmatpush1.bf16.msra.mxu0 0
  %1171 = vmatprep.subr.bf16.mxu0 0
  %1172 = vmatpush1.bf16.msra.mxu0 0
  %1173 = vmatprep.subr.bf16.mxu0 0
  %1174 = vmatpush1.bf16.msra.mxu0 0
  %1175 = vmatprep.subr.bf16.mxu0 0
  %1176 = vmatpush1.bf16.msra.mxu0 0
  %1177 = vmatprep.subr.bf16.mxu0 0
  %1178 = vmatpush1.bf16.msra.mxu0 0
  %1179 = vmatprep.subr.bf16.mxu0 0
  %1180 = vmatpush1.bf16.msra.mxu0 0
  %1181 = vmatprep.subr.bf16.mxu0 0
  %1182 = vmatpush1.bf16.msra.mxu0 0
  %1183 = vmatprep.subr.bf16.mxu0 0
  %1184 = vmatpush1.bf16.msra.mxu0 0
  %1185 = vmatprep.subr.bf16.mxu0 0
  %1186 = vmatpush1.bf16.msra.mxu0 0
  %1187 = vmatprep.subr.bf16.mxu0 0
  %1188 = vmatpush1.bf16.msra.mxu0 0
  %1189 = vmatprep.subr.bf16.mxu0 0
  %1190 = vmatpush1.bf16.msra.mxu0 0
  %1191 = vmatprep.subr.bf16.mxu0 0
  %1192 = vmatpush1.bf16.msra.mxu0 0
  %1193 = vmatprep.mubr.bf16.mxu0 0
  %1194 = vmatmul.mubr.bf16.gmra.mrb[0].mxu0 %v1093
  %v1195 = vpop.f32.mrb[0].mxu0
  %v1196 = vadd.f32 %v1147, %v1195
  %v1197 = vpop.f32.mrb[0].mxu0
  %v1198 = vpop.f32.mrb[0].mxu0
  %v1199 = vadd.f32 %v1147, %v1198
  %v1200 = vpop.f32.mrb[0].mxu0
  %1201 = vdwg.mxu0
  %s1202 = scalar_lea.vmem %s8, 16
  %v1203 = vld [vmem:[%s1202] sm:$0xf]
  %v1204 = vld [vmem:[%s1202 + $0x4] sm:$0xf]
  %v1205 = vld [vmem:[%s1202 + $0x8] sm:$0xf]
  %v1206 = vld [vmem:[%s1202 + $0xc] sm:$0xf]
  %s1207 = scalar_lea.vmem %s9, 1
  %v1208 = vld [vmem:[%s1207] sm:$0x1]
  %v1210 = vlaneseq
  %v1211 = vshrl.u32 %v1210, 7
  %v1212 = vsub.s32 0, %v1211
  %v1213 = vrot.slane %v1208, %v1212
  %v1219 = vunpack.c.l.b16 %v1203
  %v1220 = vunpack.c.l.b16 %v1204
  %v1221 = vunpack.c.l.b16 %v1205
  %v1222 = vunpack.c.l.b16 %v1206
  %v1223 = vpack.c.b16 %v1220, %v1219
  %v1224 = vpack.c.b16 %v1222, %v1221
  %1227 = vmatprep.subr.bf16.mxu0 0
  %1228 = vmatpush1.bf16.msra.mxu0 %v1223
  %1229 = vmatprep.subr.bf16.mxu0 0
  %1230 = vmatpush1.bf16.msra.mxu0 %v1224
  %1231 = vmatprep.subr.bf16.mxu0 0
  %1232 = vmatpush1.bf16.msra.mxu0 0
  %1233 = vmatprep.subr.bf16.mxu0 0
  %1234 = vmatpush1.bf16.msra.mxu0 0
  %1235 = vmatprep.subr.bf16.mxu0 0
  %1236 = vmatpush1.bf16.msra.mxu0 0
  %1237 = vmatprep.subr.bf16.mxu0 0
  %1238 = vmatpush1.bf16.msra.mxu0 0
  %1239 = vmatprep.subr.bf16.mxu0 0
  %1240 = vmatpush1.bf16.msra.mxu0 0
  %1241 = vmatprep.subr.bf16.mxu0 0
  %1242 = vmatpush1.bf16.msra.mxu0 0
  %1243 = vmatprep.subr.bf16.mxu0 0
  %1244 = vmatpush1.bf16.msra.mxu0 0
  %1245 = vmatprep.subr.bf16.mxu0 0
  %1246 = vmatpush1.bf16.msra.mxu0 0
  %1247 = vmatprep.subr.bf16.mxu0 0
  %1248 = vmatpush1.bf16.msra.mxu0 0
  %1249 = vmatprep.subr.bf16.mxu0 0
  %1250 = vmatpush1.bf16.msra.mxu0 0
  %1251 = vmatprep.subr.bf16.mxu0 0
  %1252 = vmatpush1.bf16.msra.mxu0 0
  %1253 = vmatprep.subr.bf16.mxu0 0
  %1254 = vmatpush1.bf16.msra.mxu0 0
  %1255 = vmatprep.subr.bf16.mxu0 0
  %1256 = vmatpush1.bf16.msra.mxu0 0
  %1257 = vmatprep.subr.bf16.mxu0 0
  %1258 = vmatpush1.bf16.msra.mxu0 0
  %1259 = vmatprep.mubr.bf16.mxu0 0
  %1260 = vmatmul.mubr.bf16.gmra.mrb[0].mxu0 %v1093
  %v1261 = vpop.f32.mrb[0].mxu0
  %v1262 = vadd.f32 %v1213, %v1261
  %v1263 = vpop.f32.mrb[0].mxu0
  %v1264 = vpop.f32.mrb[0].mxu0
  %v1265 = vadd.f32 %v1213, %v1264
  %v1266 = vpop.f32.mrb[0].mxu0
  %1267 = vdwg.mxu0
  %v1269 = vsel %vm324, %v1130, 0
  %v1272 = vsel %vm324, %v1133, 0
  %v1275 = vsel %vm324, %v1196, 0
  %v1278 = vsel %vm324, %v1199, 0
  %1280 = vmatprep.subr.mxu0 0.0
  %1281 = vmatpush1.xpose.msra.mxu0 %v1275
  %1282 = vmatprep.subr.mxu0 0.0
  %1283 = vmatpush1.xpose.msra.mxu0 %v1278
  %1284 = vmatprep.subr.mxu0 0.0
  %1285 = vmatpush1.xpose.msra.mxu0 0.0
  %1286 = vmatprep.subr.mxu0 0.0
  %1287 = vmatpush1.xpose.msra.mxu0 0.0
  %1288 = vmatprep.subr.mxu0 0.0
  %1289 = vmatpush1.xpose.msra.mxu0 0.0
  %1290 = vmatprep.subr.mxu0 0.0
  %1291 = vmatpush1.xpose.msra.mxu0 0.0
  %1292 = vmatprep.subr.mxu0 0.0
  %1293 = vmatpush1.xpose.msra.mxu0 0.0
  %1294 = vmatprep.subr.mxu0 0.0
  %1295 = vmatpush1.xpose.msra.mxu0 0.0
  %1296 = vmatprep.subr.mxu0 0.0
  %1297 = vmatpush1.xpose.msra.mxu0 0.0
  %1298 = vmatprep.subr.mxu0 0.0
  %1299 = vmatpush1.xpose.msra.mxu0 0.0
  %1300 = vmatprep.subr.mxu0 0.0
  %1301 = vmatpush1.xpose.msra.mxu0 0.0
  %1302 = vmatprep.subr.mxu0 0.0
  %1303 = vmatpush1.xpose.msra.mxu0 0.0
  %1304 = vmatprep.subr.mxu0 0.0
  %1305 = vmatpush1.xpose.msra.mxu0 0.0
  %1306 = vmatprep.subr.mxu0 0.0
  %1307 = vmatpush1.xpose.msra.mxu0 0.0
  %1308 = vmatprep.subr.mxu0 0.0
  %1309 = vmatpush1.xpose.msra.mxu0 0.0
  %1310 = vmatprep.subr.mxu0 0.0
  %1311 = vmatpush1.xpose.msra.mxu0 0.0
  %1312 = vmatprep.subr.mxu0 0.0
  %1313 = vmatpush1.xpose.msra.mxu0 0.0
  %1314 = vmatprep.subr.mxu0 0.0
  %1315 = vmatpush1.xpose.msra.mxu0 0.0
  %1316 = vmatprep.subr.mxu0 0.0
  %1317 = vmatpush1.xpose.msra.mxu0 0.0
  %1318 = vmatprep.subr.mxu0 0.0
  %1319 = vmatpush1.xpose.msra.mxu0 0.0
  %1320 = vmatprep.subr.mxu0 0.0
  %1321 = vmatpush1.xpose.msra.mxu0 0.0
  %1322 = vmatprep.subr.mxu0 0.0
  %1323 = vmatpush1.xpose.msra.mxu0 0.0
  %1324 = vmatprep.subr.mxu0 0.0
  %1325 = vmatpush1.xpose.msra.mxu0 0.0
  %1326 = vmatprep.subr.mxu0 0.0
  %1327 = vmatpush1.xpose.msra.mxu0 0.0
  %1328 = vmatprep.subr.mxu0 0.0
  %1329 = vmatpush1.xpose.msra.mxu0 0.0
  %1330 = vmatprep.subr.mxu0 0.0
  %1331 = vmatpush1.xpose.msra.mxu0 0.0
  %1332 = vmatprep.subr.mxu0 0.0
  %1333 = vmatpush1.xpose.msra.mxu0 0.0
  %1334 = vmatprep.subr.mxu0 0.0
  %1335 = vmatpush1.xpose.msra.mxu0 0.0
  %1336 = vmatprep.subr.mxu0 0.0
  %1337 = vmatpush1.xpose.msra.mxu0 0.0
  %1338 = vmatprep.subr.mxu0 0.0
  %1339 = vmatpush1.xpose.msra.mxu0 0.0
  %1340 = vmatprep.subr.mxu0 0.0
  %1341 = vmatpush1.xpose.msra.mxu0 0.0
  %1342 = vmatprep.subr.mxu0 0.0
  %1343 = vmatpush1.xpose.msra.mxu0 0.0
  %1344 = vmatprep.mubr.f32.mxu0 0.0
  %1345 = vmatmul.mubr.f32.gmra.mrb[0].mxu0 %v1269
  %v1346 = vpop.f32.mrb[0].mxu0
  %v1347 = vadd.f32 0.0, %v1346
  %v1348 = vpop.f32.mrb[0].mxu0
  %1349 = vmatprep.mubr.f32.mxu0 0.0
  %1350 = vmatmul.mubr.f32.gmra.mrb[0].mxu0 %v1272
  %v1351 = vpop.f32.mrb[0].mxu0
  %v1352 = vadd.f32 0.0, %v1351
  %v1353 = vpop.f32.mrb[0].mxu0
  %1354 = vdwg.mxu0
  %v1355 = vmul.f32 %v1347, 0.25
  %v1356 = vmul.f32 %v1352, 0.25
  %v1357 = vadd.f32 %v1355, %v126
  %v1358 = vadd.f32 %v1356, %v127
  %v1359 = vsel %vm324, %v1357, -inf
  %1360 = vmax.xlane.f32.xlu0 %v1359
  %v1361 = vpop.xlane.xlu0 %1360
  %v1362 = vsel %vm324, %v1358, -inf
  %1363 = vmax.xlane.f32.xlu0 %v1362
  %v1364 = vpop.xlane.xlu0 %1363
  %v1365 = vsub.f32 %v1357, %v1361
  %v1366 = vsub.f32 %v1358, %v1364
  %v1367 = vmul.f32 %v1365, 1.442695
  %v1368 = vpow.pop %v1367
  %v1369 = vmul.f32 %v1366, 1.442695
  %v1370 = vpow.pop %v1369
  %v1371 = vsel %vm324, %v1368, 0.0
  %1372 = vadd.xlane.f32.xlu0 %v1371
  %v1373 = vpop.xlane.xlu0 %1372
  %v1374 = vsel %vm324, %v1370, 0.0
  %1375 = vadd.xlane.f32.xlu0 %v1374
  %v1376 = vpop.xlane.xlu0 %1375
  %v1377 = vrcp.pop %v1373
  %v1378 = vrcp.pop %v1376
  %v1379 = vmul.f32 %v1368, %v1377
  %v1380 = vmul.f32 %v1370, %v1378
  %v1382 = vsel %vm324, %v1379, 0
  %v1385 = vsel %vm324, %v1380, 0
  %1387 = vmatprep.subr.mxu0 0.0
  %1388 = vmatpush1.msra.mxu0 %v1262
  %1389 = vmatprep.subr.mxu0 0.0
  %1390 = vmatpush1.msra.mxu0 %v1265
  %1391 = vmatprep.subr.mxu0 0.0
  %1392 = vmatpush1.msra.mxu0 0.0
  %1393 = vmatprep.subr.mxu0 0.0
  %1394 = vmatpush1.msra.mxu0 0.0
  %1395 = vmatprep.subr.mxu0 0.0
  %1396 = vmatpush1.msra.mxu0 0.0
  %1397 = vmatprep.subr.mxu0 0.0
  %1398 = vmatpush1.msra.mxu0 0.0
  %1399 = vmatprep.subr.mxu0 0.0
  %1400 = vmatpush1.msra.mxu0 0.0
  %1401 = vmatprep.subr.mxu0 0.0
  %1402 = vmatpush1.msra.mxu0 0.0
  %1403 = vmatprep.subr.mxu0 0.0
  %1404 = vmatpush1.msra.mxu0 0.0
  %1405 = vmatprep.subr.mxu0 0.0
  %1406 = vmatpush1.msra.mxu0 0.0
  %1407 = vmatprep.subr.mxu0 0.0
  %1408 = vmatpush1.msra.mxu0 0.0
  %1409 = vmatprep.subr.mxu0 0.0
  %1410 = vmatpush1.msra.mxu0 0.0
  %1411 = vmatprep.subr.mxu0 0.0
  %1412 = vmatpush1.msra.mxu0 0.0
  %1413 = vmatprep.subr.mxu0 0.0
  %1414 = vmatpush1.msra.mxu0 0.0
  %1415 = vmatprep.subr.mxu0 0.0
  %1416 = vmatpush1.msra.mxu0 0.0
  %1417 = vmatprep.subr.mxu0 0.0
  %1418 = vmatpush1.msra.mxu0 0.0
  %1419 = vmatprep.subr.mxu0 0.0
  %1420 = vmatpush1.msra.mxu0 0.0
  %1421 = vmatprep.subr.mxu0 0.0
  %1422 = vmatpush1.msra.mxu0 0.0
  %1423 = vmatprep.subr.mxu0 0.0
  %1424 = vmatpush1.msra.mxu0 0.0
  %1425 = vmatprep.subr.mxu0 0.0
  %1426 = vmatpush1.msra.mxu0 0.0
  %1427 = vmatprep.subr.mxu0 0.0
  %1428 = vmatpush1.msra.mxu0 0.0
  %1429 = vmatprep.subr.mxu0 0.0
  %1430 = vmatpush1.msra.mxu0 0.0
  %1431 = vmatprep.subr.mxu0 0.0
  %1432 = vmatpush1.msra.mxu0 0.0
  %1433 = vmatprep.subr.mxu0 0.0
  %1434 = vmatpush1.msra.mxu0 0.0
  %1435 = vmatprep.subr.mxu0 0.0
  %1436 = vmatpush1.msra.mxu0 0.0
  %1437 = vmatprep.subr.mxu0 0.0
  %1438 = vmatpush1.msra.mxu0 0.0
  %1439 = vmatprep.subr.mxu0 0.0
  %1440 = vmatpush1.msra.mxu0 0.0
  %1441 = vmatprep.subr.mxu0 0.0
  %1442 = vmatpush1.msra.mxu0 0.0
  %1443 = vmatprep.subr.mxu0 0.0
  %1444 = vmatpush1.msra.mxu0 0.0
  %1445 = vmatprep.subr.mxu0 0.0
  %1446 = vmatpush1.msra.mxu0 0.0
  %1447 = vmatprep.subr.mxu0 0.0
  %1448 = vmatpush1.msra.mxu0 0.0
  %1449 = vmatprep.subr.mxu0 0.0
  %1450 = vmatpush1.msra.mxu0 0.0
  %1451 = vmatprep.mubr.f32.mxu0 0.0
  %1452 = vmatmul.mubr.f32.gmra.mrb[0].mxu0 %v1382
  %v1453 = vpop.f32.mrb[0].mxu0
  %v1454 = vadd.f32 0.0, %v1453
  %v1455 = vpop.f32.mrb[0].mxu0
  %1456 = vmatprep.mubr.f32.mxu0 0.0
  %1457 = vmatmul.mubr.f32.gmra.mrb[0].mxu0 %v1385
  %v1458 = vpop.f32.mrb[0].mxu0
  %v1459 = vadd.f32 0.0, %v1458
  %v1460 = vpop.f32.mrb[0].mxu0
  %1461 = vdwg.mxu0
  %1462 = vrot.lane.b32.xlu0 %v1130, 112
  %v1463 = vpop.permute.xlu0 %1462
  %1464 = vrot.lane.b32.xlu0 %v1133, 112
  %v1465 = vpop.permute.xlu0 %1464
  %1466 = vrot.lane.b32.xlu0 %v1196, 112
  %v1467 = vpop.permute.xlu0 %1466
  %1468 = vrot.lane.b32.xlu0 %v1199, 112
  %v1469 = vpop.permute.xlu0 %1468
  %v1470 = vsel %vm324, %v1463, 0
  %v1472 = vsel %vm324, %v1465, 0
  %v1474 = vsel %vm324, %v1467, 0
  %v1476 = vsel %vm324, %v1469, 0
  %1478 = vmatprep.subr.mxu0 0.0
  %1479 = vmatpush1.xpose.msra.mxu0 %v1474
  %1480 = vmatprep.subr.mxu0 0.0
  %1481 = vmatpush1.xpose.msra.mxu0 %v1476
  %1482 = vmatprep.subr.mxu0 0.0
  %1483 = vmatpush1.xpose.msra.mxu0 0.0
  %1484 = vmatprep.subr.mxu0 0.0
  %1485 = vmatpush1.xpose.msra.mxu0 0.0
  %1486 = vmatprep.subr.mxu0 0.0
  %1487 = vmatpush1.xpose.msra.mxu0 0.0
  %1488 = vmatprep.subr.mxu0 0.0
  %1489 = vmatpush1.xpose.msra.mxu0 0.0
  %1490 = vmatprep.subr.mxu0 0.0
  %1491 = vmatpush1.xpose.msra.mxu0 0.0
  %1492 = vmatprep.subr.mxu0 0.0
  %1493 = vmatpush1.xpose.msra.mxu0 0.0
  %1494 = vmatprep.subr.mxu0 0.0
  %1495 = vmatpush1.xpose.msra.mxu0 0.0
  %1496 = vmatprep.subr.mxu0 0.0
  %1497 = vmatpush1.xpose.msra.mxu0 0.0
  %1498 = vmatprep.subr.mxu0 0.0
  %1499 = vmatpush1.xpose.msra.mxu0 0.0
  %1500 = vmatprep.subr.mxu0 0.0
  %1501 = vmatpush1.xpose.msra.mxu0 0.0
  %1502 = vmatprep.subr.mxu0 0.0
  %1503 = vmatpush1.xpose.msra.mxu0 0.0
  %1504 = vmatprep.subr.mxu0 0.0
  %1505 = vmatpush1.xpose.msra.mxu0 0.0
  %1506 = vmatprep.subr.mxu0 0.0
  %1507 = vmatpush1.xpose.msra.mxu0 0.0
  %1508 = vmatprep.subr.mxu0 0.0
  %1509 = vmatpush1.xpose.msra.mxu0 0.0
  %1510 = vmatprep.subr.mxu0 0.0
  %1511 = vmatpush1.xpose.msra.mxu0 0.0
  %1512 = vmatprep.subr.mxu0 0.0
  %1513 = vmatpush1.xpose.msra.mxu0 0.0
  %1514 = vmatprep.subr.mxu0 0.0
  %1515 = vmatpush1.xpose.msra.mxu0 0.0
  %1516 = vmatprep.subr.mxu0 0.0
  %1517 = vmatpush1.xpose.msra.mxu0 0.0
  %1518 = vmatprep.subr.mxu0 0.0
  %1519 = vmatpush1.xpose.msra.mxu0 0.0
  %1520 = vmatprep.subr.mxu0 0.0
  %1521 = vmatpush1.xpose.msra.mxu0 0.0
  %1522 = vmatprep.subr.mxu0 0.0
  %1523 = vmatpush1.xpose.msra.mxu0 0.0
  %1524 = vmatprep.subr.mxu0 0.0
  %1525 = vmatpush1.xpose.msra.mxu0 0.0
  %1526 = vmatprep.subr.mxu0 0.0
  %1527 = vmatpush1.xpose.msra.mxu0 0.0
  %1528 = vmatprep.subr.mxu0 0.0
  %1529 = vmatpush1.xpose.msra.mxu0 0.0
  %1530 = vmatprep.subr.mxu0 0.0
  %1531 = vmatpush1.xpose.msra.mxu0 0.0
  %1532 = vmatprep.subr.mxu0 0.0
  %1533 = vmatpush1.xpose.msra.mxu0 0.0
  %1534 = vmatprep.subr.mxu0 0.0
  %1535 = vmatpush1.xpose.msra.mxu0 0.0
  %1536 = vmatprep.subr.mxu0 0.0
  %1537 = vmatpush1.xpose.msra.mxu0 0.0
  %1538 = vmatprep.subr.mxu0 0.0
  %1539 = vmatpush1.xpose.msra.mxu0 0.0
  %1540 = vmatprep.subr.mxu0 0.0
  %1541 = vmatpush1.xpose.msra.mxu0 0.0
  %1542 = vmatprep.mubr.f32.mxu0 0.0
  %1543 = vmatmul.mubr.f32.gmra.mrb[0].mxu0 %v1470
  %v1544 = vpop.f32.mrb[0].mxu0
  %v1545 = vadd.f32 0.0, %v1544
  %v1546 = vpop.f32.mrb[0].mxu0
  %1547 = vmatprep.mubr.f32.mxu0 0.0
  %1548 = vmatmul.mubr.f32.gmra.mrb[0].mxu0 %v1472
  %v1549 = vpop.f32.mrb[0].mxu0
  %v1550 = vadd.f32 0.0, %v1549
  %v1551 = vpop.f32.mrb[0].mxu0
  %1552 = vdwg.mxu0
  %v1553 = vmul.f32 %v1545, 0.25
  %v1554 = vmul.f32 %v1550, 0.25
  %v1555 = vadd.f32 %v1553, %v126
  %v1556 = vadd.f32 %v1554, %v127
  %v1557 = vsel %vm324, %v1555, -inf
  %1558 = vmax.xlane.f32.xlu0 %v1557
  %v1559 = vpop.xlane.xlu0 %1558
  %v1560 = vsel %vm324, %v1556, -inf
  %1561 = vmax.xlane.f32.xlu0 %v1560
  %v1562 = vpop.xlane.xlu0 %1561
  %v1563 = vsub.f32 %v1555, %v1559
  %v1564 = vsub.f32 %v1556, %v1562
  %v1565 = vmul.f32 %v1563, 1.442695
  %v1566 = vpow.pop %v1565
  %v1567 = vmul.f32 %v1564, 1.442695
  %v1568 = vpow.pop %v1567
  %v1569 = vsel %vm324, %v1566, 0.0
  %1570 = vadd.xlane.f32.xlu0 %v1569
  %v1571 = vpop.xlane.xlu0 %1570
  %v1572 = vsel %vm324, %v1568, 0.0
  %1573 = vadd.xlane.f32.xlu0 %v1572
  %v1574 = vpop.xlane.xlu0 %1573
  %v1575 = vrcp.pop %v1571
  %v1576 = vrcp.pop %v1574
  %v1577 = vmul.f32 %v1566, %v1575
  %v1578 = vmul.f32 %v1568, %v1576
  %1581 = vrot.lane.b32.xlu0 %v1262, 112
  %v1582 = vpop.permute.xlu0 %1581
  %1583 = vrot.lane.b32.xlu0 %v1265, 112
  %v1584 = vpop.permute.xlu0 %1583
  %v1588 = vsel %vm324, %v1577, 0
  %v1591 = vsel %vm324, %v1578, 0
  %1593 = vmatprep.subr.mxu0 0.0
  %1594 = vmatpush1.msra.mxu0 %v1582
  %1595 = vmatprep.subr.mxu0 0.0
  %1596 = vmatpush1.msra.mxu0 %v1584
  %1597 = vmatprep.subr.mxu0 0.0
  %1598 = vmatpush1.msra.mxu0 0.0
  %1599 = vmatprep.subr.mxu0 0.0
  %1600 = vmatpush1.msra.mxu0 0.0
  %1601 = vmatprep.subr.mxu0 0.0
  %1602 = vmatpush1.msra.mxu0 0.0
  %1603 = vmatprep.subr.mxu0 0.0
  %1604 = vmatpush1.msra.mxu0 0.0
  %1605 = vmatprep.subr.mxu0 0.0
  %1606 = vmatpush1.msra.mxu0 0.0
  %1607 = vmatprep.subr.mxu0 0.0
  %1608 = vmatpush1.msra.mxu0 0.0
  %1609 = vmatprep.subr.mxu0 0.0
  %1610 = vmatpush1.msra.mxu0 0.0
  %1611 = vmatprep.subr.mxu0 0.0
  %1612 = vmatpush1.msra.mxu0 0.0
  %1613 = vmatprep.subr.mxu0 0.0
  %1614 = vmatpush1.msra.mxu0 0.0
  %1615 = vmatprep.subr.mxu0 0.0
  %1616 = vmatpush1.msra.mxu0 0.0
  %1617 = vmatprep.subr.mxu0 0.0
  %1618 = vmatpush1.msra.mxu0 0.0
  %1619 = vmatprep.subr.mxu0 0.0
  %1620 = vmatpush1.msra.mxu0 0.0
  %1621 = vmatprep.subr.mxu0 0.0
  %1622 = vmatpush1.msra.mxu0 0.0
  %1623 = vmatprep.subr.mxu0 0.0
  %1624 = vmatpush1.msra.mxu0 0.0
  %1625 = vmatprep.subr.mxu0 0.0
  %1626 = vmatpush1.msra.mxu0 0.0
  %1627 = vmatprep.subr.mxu0 0.0
  %1628 = vmatpush1.msra.mxu0 0.0
  %1629 = vmatprep.subr.mxu0 0.0
  %1630 = vmatpush1.msra.mxu0 0.0
  %1631 = vmatprep.subr.mxu0 0.0
  %1632 = vmatpush1.msra.mxu0 0.0
  %1633 = vmatprep.subr.mxu0 0.0
  %1634 = vmatpush1.msra.mxu0 0.0
  %1635 = vmatprep.subr.mxu0 0.0
  %1636 = vmatpush1.msra.mxu0 0.0
  %1637 = vmatprep.subr.mxu0 0.0
  %1638 = vmatpush1.msra.mxu0 0.0
  %1639 = vmatprep.subr.mxu0 0.0
  %1640 = vmatpush1.msra.mxu0 0.0
  %1641 = vmatprep.subr.mxu0 0.0
  %1642 = vmatpush1.msra.mxu0 0.0
  %1643 = vmatprep.subr.mxu0 0.0
  %1644 = vmatpush1.msra.mxu0 0.0
  %1645 = vmatprep.subr.mxu0 0.0
  %1646 = vmatpush1.msra.mxu0 0.0
  %1647 = vmatprep.subr.mxu0 0.0
  %1648 = vmatpush1.msra.mxu0 0.0
  %1649 = vmatprep.subr.mxu0 0.0
  %1650 = vmatpush1.msra.mxu0 0.0
  %1651 = vmatprep.subr.mxu0 0.0
  %1652 = vmatpush1.msra.mxu0 0.0
  %1653 = vmatprep.subr.mxu0 0.0
  %1654 = vmatpush1.msra.mxu0 0.0
  %1655 = vmatprep.subr.mxu0 0.0
  %1656 = vmatpush1.msra.mxu0 0.0
  %1657 = vmatprep.mubr.f32.mxu0 0.0
  %1658 = vmatmul.mubr.f32.gmra.mrb[0].mxu0 %v1588
  %v1659 = vpop.f32.mrb[0].mxu0
  %v1660 = vadd.f32 0.0, %v1659
  %v1661 = vpop.f32.mrb[0].mxu0
  %1662 = vmatprep.mubr.f32.mxu0 0.0
  %1663 = vmatmul.mubr.f32.gmra.mrb[0].mxu0 %v1591
  %v1664 = vpop.f32.mrb[0].mxu0
  %v1665 = vadd.f32 0.0, %v1664
  %v1666 = vpop.f32.mrb[0].mxu0
  %1667 = vdwg.mxu0
  %1670 = vrot.lane.b32.xlu0 %v1660, 16
  %v1671 = vpop.permute.xlu0 %1670
  %1672 = vrot.lane.b32.xlu0 %v1665, 16
  %v1673 = vpop.permute.xlu0 %1672
  %v1676 = vsel %vm324, %v1454, %v1671
  %v1677 = vsel %vm324, %v1459, %v1673
  %v1678 = vpack.c.bf16 %v1677, %v1676
  %s1679 = scalar_lea.vmem %s10, 16
  %v1680 = vld [vmem:[%s1679] sm:$0xf]
  %v1681 = vld [vmem:[%s1679 + $0x4] sm:$0xf]
  %v1682 = vld [vmem:[%s1679 + $0x8] sm:$0xf]
  %v1683 = vld [vmem:[%s1679 + $0xc] sm:$0xf]
  %s1684 = scalar_lea.vmem %s11, 1
  %v1685 = vld [vmem:[%s1684] sm:$0x1]
  %v1687 = vlaneseq
  %v1688 = vshrl.u32 %v1687, 7
  %v1689 = vsub.s32 0, %v1688
  %v1690 = vrot.slane %v1685, %v1689
  %v1696 = vunpack.c.l.b16 %v1680
  %v1697 = vunpack.c.l.b16 %v1681
  %v1698 = vunpack.c.l.b16 %v1682
  %v1699 = vunpack.c.l.b16 %v1683
  %v1700 = vpack.c.b16 %v1697, %v1696
  %v1701 = vpack.c.b16 %v1699, %v1698
  %v1705 = vsel %vm82, %v1678, 0
  %1707 = vmatprep.subr.bf16.mxu0 0
  %1708 = vmatpush1.bf16.msra.mxu0 %v1700
  %1709 = vmatprep.subr.bf16.mxu0 0
  %1710 = vmatpush1.bf16.msra.mxu0 %v1701
  %1711 = vmatprep.subr.bf16.mxu0 0
  %1712 = vmatpush1.bf16.msra.mxu0 0
  %1713 = vmatprep.subr.bf16.mxu0 0
  %1714 = vmatpush1.bf16.msra.mxu0 0
  %1715 = vmatprep.subr.bf16.mxu0 0
  %1716 = vmatpush1.bf16.msra.mxu0 0
  %1717 = vmatprep.subr.bf16.mxu0 0
  %1718 = vmatpush1.bf16.msra.mxu0 0
  %1719 = vmatprep.subr.bf16.mxu0 0
  %1720 = vmatpush1.bf16.msra.mxu0 0
  %1721 = vmatprep.subr.bf16.mxu0 0
  %1722 = vmatpush1.bf16.msra.mxu0 0
  %1723 = vmatprep.subr.bf16.mxu0 0
  %1724 = vmatpush1.bf16.msra.mxu0 0
  %1725 = vmatprep.subr.bf16.mxu0 0
  %1726 = vmatpush1.bf16.msra.mxu0 0
  %1727 = vmatprep.subr.bf16.mxu0 0
  %1728 = vmatpush1.bf16.msra.mxu0 0
  %1729 = vmatprep.subr.bf16.mxu0 0
  %1730 = vmatpush1.bf16.msra.mxu0 0
  %1731 = vmatprep.subr.bf16.mxu0 0
  %1732 = vmatpush1.bf16.msra.mxu0 0
  %1733 = vmatprep.subr.bf16.mxu0 0
  %1734 = vmatpush1.bf16.msra.mxu0 0
  %1735 = vmatprep.subr.bf16.mxu0 0
  %1736 = vmatpush1.bf16.msra.mxu0 0
  %1737 = vmatprep.subr.bf16.mxu0 0
  %1738 = vmatpush1.bf16.msra.mxu0 0
  %1739 = vmatprep.mubr.bf16.mxu0 0
  %1740 = vmatmul.mubr.bf16.gmra.mrb[0].mxu0 %v1705
  %v1741 = vpop.f32.mrb[0].mxu0
  %v1742 = vadd.f32 %v1690, %v1741
  %v1743 = vpop.f32.mrb[0].mxu0
  %v1744 = vpop.f32.mrb[0].mxu0
  %v1745 = vadd.f32 %v1690, %v1744
  %v1746 = vpop.f32.mrb[0].mxu0
  %1747 = vdwg.mxu0
  %v1748 = vadd.f32 %v1064, %v1742
  %v1749 = vadd.f32 %v1065, %v1745
  %s1750 = scalar_lea.vmem %s12, 1
  %v1751 = vld [vmem:[%s1750] sm:$0x1]
  %s1752 = scalar_lea.vmem %s13, 1
  %v1753 = vld [vmem:[%s1752] sm:$0x1]
  %v1754 = vsel %vm82, %v1748, 0.0
  %1755 = vadd.xlane.f32.xlu0 %v1754
  %v1756 = vpop.xlane.xlu0 %1755
  %v1757 = vsel %vm82, %v1749, 0.0
  %1758 = vadd.xlane.f32.xlu0 %v1757
  %v1759 = vpop.xlane.xlu0 %1758
  %v1760 = vmul.f32 %v1756, %v89
  %v1761 = vmul.f32 %v1759, %v89
  %v1762 = vsub.f32 %v1748, %v1760
  %v1763 = vsub.f32 %v1749, %v1761
  %v1764 = vmul.f32 %v1762, %v1762
  %v1765 = vmul.f32 %v1763, %v1763
  %v1766 = vsel %vm82, %v1764, 0.0
  %1767 = vadd.xlane.f32.xlu0 %v1766
  %v1768 = vpop.xlane.xlu0 %1767
  %v1769 = vsel %vm82, %v1765, 0.0
  %1770 = vadd.xlane.f32.xlu0 %v1769
  %v1771 = vpop.xlane.xlu0 %1770
  %v1772 = vmul.f32 %v1768, %v89
  %v1773 = vmul.f32 %v1771, %v89
  %v1774 = vadd.f32 %v1772, 1e-12
  %v1775 = vadd.f32 %v1773, 1e-12
  %v1776 = vrsqrt.pop %v1774
  %v1777 = vrsqrt.pop %v1775
  %v1778 = vmul.f32 %v1762, %v1776
  %v1779 = vmul.f32 %v1763, %v1777
  %v1781 = vlaneseq
  %v1782 = vshrl.u32 %v1781, 7
  %v1783 = vsub.s32 0, %v1782
  %v1784 = vrot.slane %v1751, %v1783
  %v1786 = vmul.f32 %v1778, %v1784
  %v1787 = vmul.f32 %v1779, %v1784
  %v1789 = vlaneseq
  %v1790 = vshrl.u32 %v1789, 7
  %v1791 = vsub.s32 0, %v1790
  %v1792 = vrot.slane %v1753, %v1791
  %v1794 = vadd.f32 %v1786, %v1792
  %v1795 = vadd.f32 %v1787, %v1792
  %v1796 = vpack.c.bf16 %v1795, %v1794
  %s1797 = scalar_lea.vmem %s14, 16
  %v1798 = vld [vmem:[%s1797] sm:$0xf]
  %v1799 = vld [vmem:[%s1797 + $0x4] sm:$0xf]
  %v1800 = vld [vmem:[%s1797 + $0x8] sm:$0xf]
  %v1801 = vld [vmem:[%s1797 + $0xc] sm:$0xf]
  %s1802 = scalar_lea.vmem %s15, 1
  %v1803 = vld [vmem:[%s1802] sm:$0x1]
  %v1805 = vlaneseq
  %v1806 = vshrl.u32 %v1805, 7
  %v1807 = vsub.s32 0, %v1806
  %v1808 = vrot.slane %v1803, %v1807
  %v1814 = vunpack.c.l.b16 %v1798
  %v1815 = vunpack.c.l.b16 %v1799
  %v1816 = vunpack.c.l.b16 %v1800
  %v1817 = vunpack.c.l.b16 %v1801
  %v1818 = vpack.c.b16 %v1815, %v1814
  %v1819 = vpack.c.b16 %v1817, %v1816
  %v1823 = vsel %vm82, %v1796, 0
  %1825 = vmatprep.subr.bf16.mxu0 0
  %1826 = vmatpush1.bf16.msra.mxu0 %v1818
  %1827 = vmatprep.subr.bf16.mxu0 0
  %1828 = vmatpush1.bf16.msra.mxu0 %v1819
  %1829 = vmatprep.subr.bf16.mxu0 0
  %1830 = vmatpush1.bf16.msra.mxu0 0
  %1831 = vmatprep.subr.bf16.mxu0 0
  %1832 = vmatpush1.bf16.msra.mxu0 0
  %1833 = vmatprep.subr.bf16.mxu0 0
  %1834 = vmatpush1.bf16.msra.mxu0 0
  %1835 = vmatprep.subr.bf16.mxu0 0
  %1836 = vmatpush1.bf16.msra.mxu0 0
  %1837 = vmatprep.subr.bf16.mxu0 0
  %1838 = vmatpush1.bf16.msra.mxu0 0
  %1839 = vmatprep.subr.bf16.mxu0 0
  %1840 = vmatpush1.bf16.msra.mxu0 0
  %1841 = vmatprep.subr.bf16.mxu0 0
  %1842 = vmatpush1.bf16.msra.mxu0 0
  %1843 = vmatprep.subr.bf16.mxu0 0
  %1844 = vmatpush1.bf16.msra.mxu0 0
  %1845 = vmatprep.subr.bf16.mxu0 0
  %1846 = vmatpush1.bf16.msra.mxu0 0
  %1847 = vmatprep.subr.bf16.mxu0 0
  %1848 = vmatpush1.bf16.msra.mxu0 0
  %1849 = vmatprep.subr.bf16.mxu0 0
  %1850 = vmatpush1.bf16.msra.mxu0 0
  %1851 = vmatprep.subr.bf16.mxu0 0
  %1852 = vmatpush1.bf16.msra.mxu0 0
  %1853 = vmatprep.subr.bf16.mxu0 0
  %1854 = vmatpush1.bf16.msra.mxu0 0
  %1855 = vmatprep.subr.bf16.mxu0 0
  %1856 = vmatpush1.bf16.msra.mxu0 0
  %1857 = vmatprep.mubr.bf16.mxu0 0
  %1858 = vmatmul.mubr.bf16.gmra.mrb[0].mxu0 %v1823
  %v1859 = vpop.f32.mrb[0].mxu0
  %v1860 = vadd.f32 %v1808, %v1859
  %v1861 = vpop.f32.mrb[0].mxu0
  %v1862 = vpop.f32.mrb[0].mxu0
  %v1863 = vadd.f32 %v1808, %v1862
  %v1864 = vpop.f32.mrb[0].mxu0
  %1865 = vdwg.mxu0
  %v1866 = vmul.f32 %v1860, 0.5
  %v1867 = vmul.f32 %v1863, 0.5
  %v1868 = vmul.f32 %v1860, 0.044715
  %v1869 = vmul.f32 %v1863, 0.044715
  %v1870 = vmul.f32 %v1868, %v1860
  %v1871 = vmul.f32 %v1869, %v1863
  %v1872 = vmul.f32 %v1870, %v1860
  %v1873 = vmul.f32 %v1871, %v1863
  %v1874 = vadd.f32 %v1860, %v1872
  %v1875 = vadd.f32 %v1863, %v1873
  %v1876 = vmul.f32 %v1874, 0.7978846
  %v1877 = vmul.f32 %v1875, 0.7978846
  %v1878 = vtanh.pop %v1876
  %v1879 = vtanh.pop %v1877
  %v1880 = vadd.f32 %v1878, 1.0
  %v1881 = vadd.f32 %v1879, 1.0
  %v1882 = vmul.f32 %v1866, %v1880
  %v1883 = vmul.f32 %v1867, %v1881
  %v1884 = vpack.c.bf16 %v1883, %v1882
  %s1885 = scalar_lea.vmem %s16, 32
  %v1886 = vld [vmem:[%s1885] sm:$0xf]
  %v1887 = vld [vmem:[%s1885 + $0x4] sm:$0xf]
  %v1888 = vld [vmem:[%s1885 + $0x8] sm:$0xf]
  %v1889 = vld [vmem:[%s1885 + $0xc] sm:$0xf]
  %v1890 = vld [vmem:[%s1885 + $0x10] sm:$0xf]
  %v1891 = vld [vmem:[%s1885 + $0x14] sm:$0xf]
  %v1892 = vld [vmem:[%s1885 + $0x18] sm:$0xf]
  %v1893 = vld [vmem:[%s1885 + $0x1c] sm:$0xf]
  %s1894 = scalar_lea.vmem %s17, 1
  %v1895 = vld [vmem:[%s1894] sm:$0x1]
  %v1897 = vlaneseq
  %v1898 = vshrl.u32 %v1897, 7
  %v1899 = vsub.s32 0, %v1898
  %v1900 = vrot.slane %v1895, %v1899
  %v1910 = vunpack.c.l.b16 %v1886
  %v1911 = vunpack.c.l.b16 %v1887
  %v1912 = vunpack.c.l.b16 %v1888
  %v1913 = vunpack.c.l.b16 %v1889
  %v1914 = vunpack.c.l.b16 %v1890
  %v1915 = vunpack.c.l.b16 %v1891
  %v1916 = vunpack.c.l.b16 %v1892
  %v1917 = vunpack.c.l.b16 %v1893
  %v1918 = vpack.c.b16 %v1911, %v1910
  %v1919 = vpack.c.b16 %v1913, %v1912
  %v1920 = vpack.c.b16 %v1915, %v1914
  %v1921 = vpack.c.b16 %v1917, %v1916
  %v1927 = vsel %vm975, %v1884, 0
  %1929 = vmatprep.subr.bf16.mxu0 0
  %1930 = vmatpush1.bf16.msra.mxu0 %v1918
  %1931 = vmatprep.subr.bf16.mxu0 0
  %1932 = vmatpush1.bf16.msra.mxu0 %v1919
  %1933 = vmatprep.subr.bf16.mxu0 0
  %1934 = vmatpush1.bf16.msra.mxu0 %v1920
  %1935 = vmatprep.subr.bf16.mxu0 0
  %1936 = vmatpush1.bf16.msra.mxu0 %v1921
  %1937 = vmatprep.subr.bf16.mxu0 0
  %1938 = vmatpush1.bf16.msra.mxu0 0
  %1939 = vmatprep.subr.bf16.mxu0 0
  %1940 = vmatpush1.bf16.msra.mxu0 0
  %1941 = vmatprep.subr.bf16.mxu0 0
  %1942 = vmatpush1.bf16.msra.mxu0 0
  %1943 = vmatprep.subr.bf16.mxu0 0
  %1944 = vmatpush1.bf16.msra.mxu0 0
  %1945 = vmatprep.subr.bf16.mxu0 0
  %1946 = vmatpush1.bf16.msra.mxu0 0
  %1947 = vmatprep.subr.bf16.mxu0 0
  %1948 = vmatpush1.bf16.msra.mxu0 0
  %1949 = vmatprep.subr.bf16.mxu0 0
  %1950 = vmatpush1.bf16.msra.mxu0 0
  %1951 = vmatprep.subr.bf16.mxu0 0
  %1952 = vmatpush1.bf16.msra.mxu0 0
  %1953 = vmatprep.subr.bf16.mxu0 0
  %1954 = vmatpush1.bf16.msra.mxu0 0
  %1955 = vmatprep.subr.bf16.mxu0 0
  %1956 = vmatpush1.bf16.msra.mxu0 0
  %1957 = vmatprep.subr.bf16.mxu0 0
  %1958 = vmatpush1.bf16.msra.mxu0 0
  %1959 = vmatprep.subr.bf16.mxu0 0
  %1960 = vmatpush1.bf16.msra.mxu0 0
  %1961 = vmatprep.mubr.bf16.mxu0 0
  %1962 = vmatmul.mubr.bf16.gmra.mrb[0].mxu0 %v1927
  %v1963 = vpop.f32.mrb[0].mxu0
  %v1964 = vadd.f32 %v1900, %v1963
  %v1965 = vpop.f32.mrb[0].mxu0
  %v1966 = vpop.f32.mrb[0].mxu0
  %v1967 = vadd.f32 %v1900, %v1966
  %v1968 = vpop.f32.mrb[0].mxu0
  %1969 = vdwg.mxu0
  %v1970 = vadd.f32 %v1794, %v1964
  %v1971 = vadd.f32 %v1795, %v1967
  %s1972 = scalar_lea.vmem %s18, 1
  %v1973 = vld [vmem:[%s1972] sm:$0x1]
  %s1974 = scalar_lea.vmem %s19, 1
  %v1975 = vld [vmem:[%s1974] sm:$0x1]
  %v1976 = vsel %vm82, %v1970, 0.0
  %1977 = vadd.xlane.f32.xlu0 %v1976
  %v1978 = vpop.xlane.xlu0 %1977
  %v1979 = vsel %vm82, %v1971, 0.0
  %1980 = vadd.xlane.f32.xlu0 %v1979
  %v1981 = vpop.xlane.xlu0 %1980
  %v1982 = vmul.f32 %v1978, %v89
  %v1983 = vmul.f32 %v1981, %v89
  %v1984 = vsub.f32 %v1970, %v1982
  %v1985 = vsub.f32 %v1971, %v1983
  %v1986 = vmul.f32 %v1984, %v1984
  %v1987 = vmul.f32 %v1985, %v1985
  %v1988 = vsel %vm82, %v1986, 0.0
  %1989 = vadd.xlane.f32.xlu0 %v1988
  %v1990 = vpop.xlane.xlu0 %1989
  %v1991 = vsel %vm82, %v1987, 0.0
  %1992 = vadd.xlane.f32.xlu0 %v1991
  %v1993 = vpop.xlane.xlu0 %1992
  %v1994 = vmul.f32 %v1990, %v89
  %v1995 = vmul.f32 %v1993, %v89
  %v1996 = vadd.f32 %v1994, 1e-12
  %v1997 = vadd.f32 %v1995, 1e-12
  %v1998 = vrsqrt.pop %v1996
  %v1999 = vrsqrt.pop %v1997
  %v2000 = vmul.f32 %v1984, %v1998
  %v2001 = vmul.f32 %v1985, %v1999
  %v2003 = vlaneseq
  %v2004 = vshrl.u32 %v2003, 7
  %v2005 = vsub.s32 0, %v2004
  %v2006 = vrot.slane %v1973, %v2005
  %v2008 = vmul.f32 %v2000, %v2006
  %v2009 = vmul.f32 %v2001, %v2006
  %v2011 = vlaneseq
  %v2012 = vshrl.u32 %v2011, 7
  %v2013 = vsub.s32 0, %v2012
  %v2014 = vrot.slane %v1975, %v2013
  %v2016 = vadd.f32 %v2008, %v2014
  %v2017 = vadd.f32 %v2009, %v2014
  %v2018 = vpack.c.bf16 %v2017, %v2016
  %v2019 = vld [vmem:[%s20] sm:$0xf]
  %v2020 = vld [vmem:[%s20 + $0x4] sm:$0xf]
  %v2021 = vld [vmem:[%s20 + $0x8] sm:$0xf]
  %v2022 = vld [vmem:[%s20 + $0xc] sm:$0xf]
  %v2023 = vld [vmem:[%s21] sm:$0x1]
  %v2025 = vlaneseq
  %v2026 = vshrl.u32 %v2025, 7
  %v2027 = vsub.s32 0, %v2026
  %v2028 = vrot.slane %v2023, %v2027
  %v2034 = vunpack.c.l.b16 %v2019
  %v2035 = vunpack.c.l.b16 %v2020
  %v2036 = vunpack.c.l.b16 %v2021
  %v2037 = vunpack.c.l.b16 %v2022
  %v2038 = vpack.c.b16 %v2035, %v2034
  %v2039 = vpack.c.b16 %v2037, %v2036
  %v2043 = vsel %vm82, %v2018, 0
  %2045 = vmatprep.subr.bf16.mxu0 0
  %2046 = vmatpush1.bf16.msra.mxu0 %v2038
  %2047 = vmatprep.subr.bf16.mxu0 0
  %2048 = vmatpush1.bf16.msra.mxu0 %v2039
  %2049 = vmatprep.subr.bf16.mxu0 0
  %2050 = vmatpush1.bf16.msra.mxu0 0
  %2051 = vmatprep.subr.bf16.mxu0 0
  %2052 = vmatpush1.bf16.msra.mxu0 0
  %2053 = vmatprep.subr.bf16.mxu0 0
  %2054 = vmatpush1.bf16.msra.mxu0 0
  %2055 = vmatprep.subr.bf16.mxu0 0
  %2056 = vmatpush1.bf16.msra.mxu0 0
  %2057 = vmatprep.subr.bf16.mxu0 0
  %2058 = vmatpush1.bf16.msra.mxu0 0
  %2059 = vmatprep.subr.bf16.mxu0 0
  %2060 = vmatpush1.bf16.msra.mxu0 0
  %2061 = vmatprep.subr.bf16.mxu0 0
  %2062 = vmatpush1.bf16.msra.mxu0 0
  %2063 = vmatprep.subr.bf16.mxu0 0
  %2064 = vmatpush1.bf16.msra.mxu0 0
  %2065 = vmatprep.subr.bf16.mxu0 0
  %2066 = vmatpush1.bf16.msra.mxu0 0
  %2067 = vmatprep.subr.bf16.mxu0 0
  %2068 = vmatpush1.bf16.msra.mxu0 0
  %2069 = vmatprep.subr.bf16.mxu0 0
  %2070 = vmatpush1.bf16.msra.mxu0 0
  %2071 = vmatprep.subr.bf16.mxu0 0
  %2072 = vmatpush1.bf16.msra.mxu0 0
  %2073 = vmatprep.subr.bf16.mxu0 0
  %2074 = vmatpush1.bf16.msra.mxu0 0
  %2075 = vmatprep.subr.bf16.mxu0 0
  %2076 = vmatpush1.bf16.msra.mxu0 0
  %2077 = vmatprep.mubr.bf16.mxu0 0
  %2078 = vmatmul.mubr.bf16.gmra.mrb[0].mxu0 %v2043
  %v2079 = vpop.f32.mrb[0].mxu0
  %v2080 = vadd.f32 %v2028, %v2079
  %v2081 = vpop.f32.mrb[0].mxu0
  %v2082 = vpop.f32.mrb[0].mxu0
  %v2083 = vadd.f32 %v2028, %v2082
  %v2084 = vpop.f32.mrb[0].mxu0
  %2085 = vdwg.mxu0
  %v2086 = vtanh.pop %v2080
  %v2087 = vtanh.pop %v2083
  %v2088 = vpack.c.bf16 %v2087, %v2086
  %v2089 = vld [vmem:[%s22] sm:$0xf]
  %v2090 = vld [vmem:[%s22 + $0x4] sm:$0xf]
  %v2091 = vld [vmem:[%s22 + $0x8] sm:$0xf]
  %v2092 = vld [vmem:[%s22 + $0xc] sm:$0xf]
  %v2093 = vld [vmem:[%s23] sm:$0x1]
  %v2095 = vlaneseq
  %v2096 = vshrl.u32 %v2095, 7
  %v2097 = vsub.s32 0, %v2096
  %v2098 = vrot.slane %v2093, %v2097
  %v2104 = vunpack.c.l.b16 %v2089
  %v2105 = vunpack.c.l.b16 %v2090
  %v2106 = vunpack.c.l.b16 %v2091
  %v2107 = vunpack.c.l.b16 %v2092
  %v2108 = vpack.c.b16 %v2105, %v2104
  %v2109 = vpack.c.b16 %v2107, %v2106
  %v2113 = vsel %vm82, %v2088, 0
  %2115 = vmatprep.subr.bf16.mxu0 0
  %2116 = vmatpush1.bf16.msra.mxu0 %v2108
  %2117 = vmatprep.subr.bf16.mxu0 0
  %2118 = vmatpush1.bf16.msra.mxu0 %v2109
  %2119 = vmatprep.subr.bf16.mxu0 0
  %2120 = vmatpush1.bf16.msra.mxu0 0
  %2121 = vmatprep.subr.bf16.mxu0 0
  %2122 = vmatpush1.bf16.msra.mxu0 0
  %2123 = vmatprep.subr.bf16.mxu0 0
  %2124 = vmatpush1.bf16.msra.mxu0 0
  %2125 = vmatprep.subr.bf16.mxu0 0
  %2126 = vmatpush1.bf16.msra.mxu0 0
  %2127 = vmatprep.subr.bf16.mxu0 0
  %2128 = vmatpush1.bf16.msra.mxu0 0
  %2129 = vmatprep.subr.bf16.mxu0 0
  %2130 = vmatpush1.bf16.msra.mxu0 0
  %2131 = vmatprep.subr.bf16.mxu0 0
  %2132 = vmatpush1.bf16.msra.mxu0 0
  %2133 = vmatprep.subr.bf16.mxu0 0
  %2134 = vmatpush1.bf16.msra.mxu0 0
  %2135 = vmatprep.subr.bf16.mxu0 0
  %2136 = vmatpush1.bf16.msra.mxu0 0
  %2137 = vmatprep.subr.bf16.mxu0 0
  %2138 = vmatpush1.bf16.msra.mxu0 0
  %2139 = vmatprep.subr.bf16.mxu0 0
  %2140 = vmatpush1.bf16.msra.mxu0 0
  %2141 = vmatprep.subr.bf16.mxu0 0
  %2142 = vmatpush1.bf16.msra.mxu0 0
  %2143 = vmatprep.subr.bf16.mxu0 0
  %2144 = vmatpush1.bf16.msra.mxu0 0
  %2145 = vmatprep.subr.bf16.mxu0 0
  %2146 = vmatpush1.bf16.msra.mxu0 0
  %2147 = vmatprep.mubr.bf16.mxu0 0
  %2148 = vmatmul.mubr.bf16.gmra.mrb[0].mxu0 %v2113
  %v2149 = vpop.f32.mrb[0].mxu0
  %v2150 = vadd.f32 %v2098, %v2149
  %v2151 = vpop.f32.mrb[0].mxu0
  %v2152 = vpop.f32.mrb[0].mxu0
  %v2153 = vadd.f32 %v2098, %v2152
  %v2154 = vpop.f32.mrb[0].mxu0
  %2155 = vdwg.mxu0
  %2156 = vst [vmem:[%s24] sm:$0xff] %v2150
  %2157 = vst [vmem:[%s24 + $0x8] sm:$0xff] %v2153
  // Predicated region
  $region98: #{sentiment_forward.1} parent=0 // pred_check
    _
  $region99: #{sentiment_forward.1} parent=0 // pred_check_branch
    %2159 = sbr.rel (0) target = $region101
  $region100: #{sentiment_forward.1} parent=0 // pred_region
    _
  $region101: #{sentiment_forward.1} parent=0 // pred_fallthru
    _
  // Predicated region
  $region102: #{sentiment_forward.1} parent=0 // pred_check
    _
  $region103: #{sentiment_forward.1} parent=0 // pred_check_branch
    %2161 = sbr.rel (0) target = $region105
  $region104: #{sentiment_forward.1} parent=0 // pred_region
    _
  $region105: #{sentiment_forward.1} parent=0 // pred_fallthru
    _

</llo_original>
